<compile_context>
chip_gen: v7x
topology: tpu7x:2x2x1
jax: 0.10.0
libtpu: 0.0.40
codegen_flags: <defaults>
</compile_context>

<pallas_src>
import functools

import jax
import jax.numpy as jnp
from jax.experimental import pallas as pl
from jax.experimental.pallas import tpu as pltpu

LEAKY_SLOPE = 0.01  # PyTorch nn.LeakyReLU default


def _leaky_relu(x):
    # max(x, 0.01*x) == LeakyReLU(x) for slope in (0, 1)
    return jnp.maximum(x, LEAKY_SLOPE * x)


def q_kernel(*refs, seg_dims, h1, h2):
    """refs = (x_seg_0, ..., x_seg_{n-1}, w1, w2, packed_params, out)."""
    n = len(seg_dims)
    seg_refs = refs[:n]
    w1_ref, w2_ref, p_ref, out_ref = refs[n], refs[n + 1], refs[n + 2], refs[n + 3]

    # Unpack the small parameters from the single packed (4, 128) array.
    b1 = p_ref[0:1, 0:h1]          # (1, h1)
    b2 = p_ref[1:2, 0:h2]          # (1, h2)
    w3_row = p_ref[2:3, 0:h2]      # (1, h2)  final-layer weight as a row
    b3 = p_ref[3:4, 0:1]           # (1, 1)

    # ---- layer 1: fused concat via per-segment partial dots ----
    acc = None
    off = 0
    for r, d in zip(seg_refs, seg_dims):
        part = jnp.dot(r[...].astype(jnp.float32),
                       w1_ref[off:off + d, :],
                       preferred_element_type=jnp.float32)
        acc = part if acc is None else acc + part
        off += d
    a1 = _leaky_relu(acc + b1)                                   # (tb, h1)

    # ---- layer 2 ----
    a2 = _leaky_relu(
        jnp.dot(a1, w2_ref[...], preferred_element_type=jnp.float32) + b2)

    # ---- output layer: VPU mul + lane reduce (skip the Nx1 MXU matmul) ----
    out = jnp.sum(a2 * w3_row, axis=-1, keepdims=True) + b3      # (tb, 1)
    out_ref[...] = out.astype(out_ref.dtype)


def q_forward(s, a_list, params, *, tb=128):
    """s, a_list: lists of (B, d_i) arrays; params: dict of Linear params."""
    segs = list(s) + list(a_list)                    # spec: s_cat first, then a_cat
    B = segs[0].shape[0]
    seg_dims = tuple(int(x.shape[1]) for x in segs)
    F = sum(seg_dims)
    w1, w2, w3 = params["w1"], params["w2"], params["w3"]
    h1, h2 = w1.shape[1], w2.shape[1]
    assert w1.shape == (F, h1) and w2.shape == (h1, h2) and w3.shape == (h2, 1)
    assert h1 <= 128 and h2 <= 128, "packed-param layout assumes hidden <= 128"

    # Pack the small parameters into one lane-dense (4, 128) array -> one DMA.
    packed = jnp.zeros((4, 128), jnp.float32)
    packed = packed.at[0, :h1].set(params["b1"].reshape(-1))
    packed = packed.at[1, :h2].set(params["b2"].reshape(-1))
    packed = packed.at[2, :h2].set(w3.reshape(-1))
    packed = packed.at[3, 0].set(params["b3"].reshape(-1)[0])

    # Batch tile: biggest sublane-aligned tile that divides B (everything fits
    # VMEM with huge margin, so tiling exists only for overhead/parallelism).
    tb = tb if (B % tb == 0) else B
    grid = (B // tb,)

    in_specs = [pl.BlockSpec((tb, d), lambda i: (i, 0)) for d in seg_dims]
    in_specs += [
        pl.BlockSpec((F, h1), lambda i: (0, 0)),      # w1: resident across grid
        pl.BlockSpec((h1, h2), lambda i: (0, 0)),     # w2: resident across grid
        pl.BlockSpec((4, 128), lambda i: (0, 0)),     # packed small params
    ]
    out_spec = pl.BlockSpec((tb, 1), lambda i: (i, 0))

    kernel = functools.partial(q_kernel, seg_dims=seg_dims, h1=h1, h2=h2)
    return pl.pallas_call(
        kernel,
        out_shape=jax.ShapeDtypeStruct((B, 1), jnp.float32),
        grid=grid,
        in_specs=in_specs,
        out_specs=out_spec,
        compiler_params=pltpu.CompilerParams(
            dimension_semantics=("parallel",)),
    )(*segs, w1, w2, packed)


def init_params(key, in_dim, h1, h2):
    """Deterministic synthetic parameters (shapes match the PyTorch module)."""
    ks = jax.random.split(key, 6)

    def lin(kw, kb, fan_in, fan_out):
        bound = 1.0 / jnp.sqrt(fan_in)
        w = jax.random.uniform(kw, (fan_in, fan_out), jnp.float32, -bound, bound)
        b = jax.random.uniform(kb, (fan_out,), jnp.float32, -bound, bound)
        return w, b

    w1, b1 = lin(ks[0], ks[1], in_dim, h1)
    w2, b2 = lin(ks[2], ks[3], h1, h2)
    w3, b3 = lin(ks[4], ks[5], h2, 1)
    return dict(w1=w1, b1=b1, w2=w2, b2=b2, w3=w3, b3=b3)


def q_forward_ref(s, a_list, p):
    """Pure-JAX reference matching the PyTorch QNet forward."""
    x = jnp.concatenate(list(s) + list(a_list), axis=-1)
    h = _leaky_relu(x @ p["w1"] + p["b1"])
    h = _leaky_relu(h @ p["w2"] + p["b2"])
    return h @ p["w3"] + p["b3"]


if __name__ == "__main__":
    # QNet(dim_s=[6, 6], dim_a=[2, 2], hidden_sizes=[64, 32]); B batched to 256
    # so the launch/DMA overhead is amortized (per the performance review).
    dim_s = [6, 6]
    dim_a = [2, 2]
    hidden_sizes = [64, 32]
    B = 256
    in_dim = sum(dim_s) + sum(dim_a)                  # 16

    key = jax.random.PRNGKey(0)
    k_s0, k_s1, k_a0, k_a1, k_p = jax.random.split(key, 5)
    s = [jax.random.normal(k_s0, (B, dim_s[0]), jnp.float32),
         jax.random.normal(k_s1, (B, dim_s[1]), jnp.float32)]
    a_list = [jax.random.normal(k_a0, (B, dim_a[0]), jnp.float32),
              jax.random.normal(k_a1, (B, dim_a[1]), jnp.float32)]
    params = init_params(k_p, in_dim, hidden_sizes[0], hidden_sizes[1])

    out = q_forward(s, a_list, params)
    out = jax.block_until_ready(out)

    ref = q_forward_ref(s, a_list, params)
    assert out.shape == (B, 1), out.shape
    assert jnp.allclose(out, ref, atol=1e-4, rtol=1e-4), (out, ref)
    print("KERNEL_OK")
</pallas_src>

<mosaic_0001>
module attributes {stable_mosaic.version = 11 : i64} {
  func.func @q_kernel(%arg0: i32, %arg1: memref<128x6xf32, #tpu.memory_space<vmem>>, %arg2: memref<128x6xf32, #tpu.memory_space<vmem>>, %arg3: memref<128x2xf32, #tpu.memory_space<vmem>>, %arg4: memref<128x2xf32, #tpu.memory_space<vmem>>, %arg5: memref<16x64xf32, #tpu.memory_space<vmem>>, %arg6: memref<64x32xf32, #tpu.memory_space<vmem>>, %arg7: memref<4x128xf32, #tpu.memory_space<vmem>>, %arg8: memref<128x1xf32, #tpu.memory_space<vmem>>) attributes {dimension_semantics = [#tpu.dimension_semantics<parallel>], iteration_bounds = array<i64: 2>, scalar_prefetch = 0 : i64, scratch_operands = 0 : i64, tpu.core_type = #tpu.core_type<tc>, window_params = [{transform_indices = @transform_0, window_bounds = array<i64: 128, 6>}, {transform_indices = @transform_1, window_bounds = array<i64: 128, 6>}, {transform_indices = @transform_2, window_bounds = array<i64: 128, 2>}, {transform_indices = @transform_3, window_bounds = array<i64: 128, 2>}, {pipeline_mode = #tpu.pipeline_mode<synchronous>, transform_indices = @transform_4, window_bounds = array<i64: 16, 64>}, {pipeline_mode = #tpu.pipeline_mode<synchronous>, transform_indices = @transform_5, window_bounds = array<i64: 64, 32>}, {pipeline_mode = #tpu.pipeline_mode<synchronous>, transform_indices = @transform_6, window_bounds = array<i64: 4, 128>}, {transform_indices = @transform_7, window_bounds = array<i64: 128, 1>}]} {
    %c0 = arith.constant 0 : index
    %c0_0 = arith.constant 0 : index
    %0 = vector.load %arg7[%c0, %c0_0] : memref<4x128xf32, #tpu.memory_space<vmem>>, vector<1x64xf32>
    %c1 = arith.constant 1 : index
    %c0_1 = arith.constant 0 : index
    %1 = vector.load %arg7[%c1, %c0_1] : memref<4x128xf32, #tpu.memory_space<vmem>>, vector<1x32xf32>
    %c2 = arith.constant 2 : index
    %c0_2 = arith.constant 0 : index
    %2 = vector.load %arg7[%c2, %c0_2] : memref<4x128xf32, #tpu.memory_space<vmem>>, vector<1x32xf32>
    %c3 = arith.constant 3 : index
    %c0_3 = arith.constant 0 : index
    %3 = vector.load %arg7[%c3, %c0_3] : memref<4x128xf32, #tpu.memory_space<vmem>>, vector<1x1xf32>
    %c0_4 = arith.constant 0 : index
    %c0_5 = arith.constant 0 : index
    %4 = vector.load %arg1[%c0_4, %c0_5] : memref<128x6xf32, #tpu.memory_space<vmem>>, vector<128x6xf32>
    %c0_6 = arith.constant 0 : index
    %c0_7 = arith.constant 0 : index
    %5 = vector.load %arg5[%c0_6, %c0_7] : memref<16x64xf32, #tpu.memory_space<vmem>>, vector<6x64xf32>
    %cst = arith.constant dense<0.000000e+00> : vector<128x64xf32>
    %6 = tpu.matmul %4, %5, %cst {dimension_numbers = #tpu.dot_dimension_numbers<[1], [0], [0], [1], [0, 0, 1, 1], [], []>} : vector<128x6xf32>, vector<6x64xf32>, vector<128x64xf32> -> vector<128x64xf32>
    %c0_8 = arith.constant 0 : index
    %c0_9 = arith.constant 0 : index
    %7 = vector.load %arg2[%c0_8, %c0_9] : memref<128x6xf32, #tpu.memory_space<vmem>>, vector<128x6xf32>
    %c6 = arith.constant 6 : index
    %c0_10 = arith.constant 0 : index
    %8 = vector.load %arg5[%c6, %c0_10] : memref<16x64xf32, #tpu.memory_space<vmem>>, vector<6x64xf32>
    %cst_11 = arith.constant dense<0.000000e+00> : vector<128x64xf32>
    %9 = tpu.matmul %7, %8, %cst_11 {dimension_numbers = #tpu.dot_dimension_numbers<[1], [0], [0], [1], [0, 0, 1, 1], [], []>} : vector<128x6xf32>, vector<6x64xf32>, vector<128x64xf32> -> vector<128x64xf32>
    %10 = arith.addf %6, %9 : vector<128x64xf32>
    %c0_12 = arith.constant 0 : index
    %c0_13 = arith.constant 0 : index
    %11 = vector.load %arg3[%c0_12, %c0_13] : memref<128x2xf32, #tpu.memory_space<vmem>>, vector<128x2xf32>
    %c12 = arith.constant 12 : index
    %c0_14 = arith.constant 0 : index
    %12 = vector.load %arg5[%c12, %c0_14] : memref<16x64xf32, #tpu.memory_space<vmem>>, vector<2x64xf32>
    %cst_15 = arith.constant dense<0.000000e+00> : vector<128x64xf32>
    %13 = tpu.matmul %11, %12, %cst_15 {dimension_numbers = #tpu.dot_dimension_numbers<[1], [0], [0], [1], [0, 0, 1, 1], [], []>} : vector<128x2xf32>, vector<2x64xf32>, vector<128x64xf32> -> vector<128x64xf32>
    %14 = arith.addf %10, %13 : vector<128x64xf32>
    %c0_16 = arith.constant 0 : index
    %c0_17 = arith.constant 0 : index
    %15 = vector.load %arg4[%c0_16, %c0_17] : memref<128x2xf32, #tpu.memory_space<vmem>>, vector<128x2xf32>
    %c14 = arith.constant 14 : index
    %c0_18 = arith.constant 0 : index
    %16 = vector.load %arg5[%c14, %c0_18] : memref<16x64xf32, #tpu.memory_space<vmem>>, vector<2x64xf32>
    %cst_19 = arith.constant dense<0.000000e+00> : vector<128x64xf32>
    %17 = tpu.matmul %15, %16, %cst_19 {dimension_numbers = #tpu.dot_dimension_numbers<[1], [0], [0], [1], [0, 0, 1, 1], [], []>} : vector<128x2xf32>, vector<2x64xf32>, vector<128x64xf32> -> vector<128x64xf32>
    %18 = arith.addf %14, %17 : vector<128x64xf32>
    %19 = vector.broadcast %0 : vector<1x64xf32> to vector<128x64xf32>
    %20 = arith.addf %18, %19 : vector<128x64xf32>
    %cst_20 = arith.constant 0.00999999977 : f32
    %21 = vector.broadcast %cst_20 : f32 to vector<128x64xf32>
    %22 = arith.mulf %21, %20 : vector<128x64xf32>
    %23 = arith.maximumf %20, %22 : vector<128x64xf32>
    %c0_21 = arith.constant 0 : index
    %c0_22 = arith.constant 0 : index
    %24 = vector.load %arg6[%c0_21, %c0_22] : memref<64x32xf32, #tpu.memory_space<vmem>>, vector<64x32xf32>
    %cst_23 = arith.constant dense<0.000000e+00> : vector<128x32xf32>
    %25 = tpu.matmul %23, %24, %cst_23 {dimension_numbers = #tpu.dot_dimension_numbers<[1], [0], [0], [1], [0, 0, 1, 1], [], []>} : vector<128x64xf32>, vector<64x32xf32>, vector<128x32xf32> -> vector<128x32xf32>
    %26 = vector.broadcast %1 : vector<1x32xf32> to vector<128x32xf32>
    %27 = arith.addf %25, %26 : vector<128x32xf32>
    %cst_24 = arith.constant 0.00999999977 : f32
    %28 = vector.broadcast %cst_24 : f32 to vector<128x32xf32>
    %29 = arith.mulf %28, %27 : vector<128x32xf32>
    %30 = arith.maximumf %27, %29 : vector<128x32xf32>
    %31 = vector.broadcast %2 : vector<1x32xf32> to vector<128x32xf32>
    %32 = arith.mulf %30, %31 : vector<128x32xf32>
    %cst_25 = arith.constant dense<0.000000e+00> : vector<128xf32>
    %33 = vector.multi_reduction <add>, %32, %cst_25 [1] : vector<128x32xf32> to vector<128xf32>
    %34 = vector.shape_cast %33 : vector<128xf32> to vector<128x1xf32>
    %35 = vector.broadcast %3 : vector<1x1xf32> to vector<128x1xf32>
    %36 = arith.addf %34, %35 : vector<128x1xf32>
    %c0_26 = arith.constant 0 : index
    %c0_27 = arith.constant 0 : index
    %37 = vector.load %arg8[%c0_26, %c0_27] : memref<128x1xf32, #tpu.memory_space<vmem>>, vector<128x1xf32>
    tpu.vector_store %arg8[%c0_26, %c0_27], %36 {strides = array<i32>} : memref<128x1xf32, #tpu.memory_space<vmem>>, vector<128x1xf32>,
    return
  }
  func.func @transform_0(%arg0: i32) -> (i32, i32) {
    %c0_i32 = arith.constant 0 : i32
    %c0_i32_0 = arith.constant 0 : i32
    return %arg0, %c0_i32 : i32, i32
  }
  func.func @transform_1(%arg0: i32) -> (i32, i32) {
    %c0_i32 = arith.constant 0 : i32
    %c0_i32_0 = arith.constant 0 : i32
    return %arg0, %c0_i32 : i32, i32
  }
  func.func @transform_2(%arg0: i32) -> (i32, i32) {
    %c0_i32 = arith.constant 0 : i32
    %c0_i32_0 = arith.constant 0 : i32
    return %arg0, %c0_i32 : i32, i32
  }
  func.func @transform_3(%arg0: i32) -> (i32, i32) {
    %c0_i32 = arith.constant 0 : i32
    %c0_i32_0 = arith.constant 0 : i32
    return %arg0, %c0_i32 : i32, i32
  }
  func.func @transform_4(%arg0: i32) -> (i32, i32) {
    %c0_i32 = arith.constant 0 : i32
    %c0_i32_0 = arith.constant 0 : i32
    %c0_i32_1 = arith.constant 0 : i32
    return %c0_i32, %c0_i32_0 : i32, i32
  }
  func.func @transform_5(%arg0: i32) -> (i32, i32) {
    %c0_i32 = arith.constant 0 : i32
    %c0_i32_0 = arith.constant 0 : i32
    %c0_i32_1 = arith.constant 0 : i32
    return %c0_i32, %c0_i32_0 : i32, i32
  }
  func.func @transform_6(%arg0: i32) -> (i32, i32) {
    %c0_i32 = arith.constant 0 : i32
    %c0_i32_0 = arith.constant 0 : i32
    %c0_i32_1 = arith.constant 0 : i32
    return %c0_i32, %c0_i32_0 : i32, i32
  }
  func.func @transform_7(%arg0: i32) -> (i32, i32) {
    %c0_i32 = arith.constant 0 : i32
    %c0_i32_0 = arith.constant 0 : i32
    return %arg0, %c0_i32 : i32, i32
  }
}

</mosaic_0001>

<llo_original>
// kernel: tpu_custom_call.1
$region0: #{tpu_custom_call.1}
  #allocation0 [shape = 'u32[]', space=smem, size = 0x4, offset = 0x4, fixed_abs, tag = 'smem constant byte address 0x4 - core index']
  #allocation1 [shape = 'u32[144,128]{1,0:T(1,128)}', space=vmem, size = 0x12000, scoped, tag = 'internal scratch']
  %s0 = inlined_call_operand.vmem [shape: f32[256,6], index: 0, kind: input, shape index: {}]
  %s1 = inlined_call_operand.vmem [shape: f32[256,6], index: 1, kind: input, shape index: {}]
  %s2 = inlined_call_operand.vmem [shape: f32[256,2], index: 2, kind: input, shape index: {}]
  %s3 = inlined_call_operand.vmem [shape: f32[256,2], index: 3, kind: input, shape index: {}]
  %s4 = inlined_call_operand.vmem [shape: f32[16,64], index: 4, kind: input, shape index: {}]
  %s5 = inlined_call_operand.vmem [shape: f32[64,32], index: 5, kind: input, shape index: {}]
  %s6 = inlined_call_operand.vmem [shape: f32[4,128], index: 6, kind: input, shape index: {}]
  %s7 = inlined_call_operand.vmem [shape: f32[256,1], index: 7, kind: output, shape index: {}]
  %s8 = sld [smem:[#allocation0]]
  $region61: #{tpu_custom_call.1} parent=0
    _
  %s10 = ssub.s32 1, %s8
  %s11 = scalar_select 0, %s10, %s8
  loop: start=0, step=1, limit=4
  $region2: #{tpu_custom_call.1} parent=0 // loop_pre_header
    _
  $region3: #{tpu_custom_call.1} parent=0 // loop_header
    %s13 = sphi 0, %s17
    %p14 = scmp.ge.s32.totalorder %s13, 4
    %s23 = sphi 0, %s25
    %s26 = sphi 0, %s23
    %s27 = sphi 0, %s26
    %s43 = sphi 0, %s27
    %s49 = sphi 0, %s51
    %s52 = sphi 0, %s49
    %s53 = sphi 0, %s52
    %s69 = sphi 0, %s53
    %s75 = sphi 0, %s77
    %s78 = sphi 0, %s75
    %s79 = sphi 0, %s78
    %s95 = sphi 0, %s79
    %s101 = sphi 0, %s103
    %s104 = sphi 0, %s101
    %s105 = sphi 0, %s104
    %s121 = sphi 0, %s105
    %s125 = sphi 0, %s125
    %s127 = sphi 0, %s125
    %s128 = sphi 0, %s127
    %s142 = sphi 0, %s128
    %s146 = sphi 0, %s146
    %s148 = sphi 0, %s146
    %s149 = sphi 0, %s148
    %s163 = sphi 0, %s149
    %s167 = sphi 0, %s167
    %s169 = sphi 0, %s167
    %s170 = sphi 0, %s169
    %s184 = sphi 0, %s170
    %s190 = sphi 0, %s192
    %s193 = sphi 0, %s190
    %s194 = sphi 0, %s193
    %s210 = sphi 0, %s194
  $region4: #{tpu_custom_call.1} parent=0 // loop_header_branch
    %16 = sbr.rel (%p14) target = $region8
  $region5: #{tpu_custom_call.1} parent=0 // loop_body
    %s18 = ssub.s32 %s13, 1
    %s19 = ssub.s32 %s13, 2
    %s20 = sadd.s32 %s13, 1
    %s21 = ssub.s32 %s13, %s20
    %p22 = scmp.eq.s32.totalorder %s21, 0
    %s24 = sadd.s32 %s23, 1
    %s25 = scalar_select %p22, %s23, %s24
    %p28 = pneg %p22
    %p29 = scmp.eq.s32.totalorder %s13, 1
    %p30 = por %p28, %p29
    %p31 = scmp.ne.s32.totalorder %s23, %s26
    %p32 = scmp.eq.s32.totalorder %s13, 0
    %p33 = por %p31, %p32
    %p34 = scmp.ne.s32.totalorder %s23, %s26
    %p35 = scmp.eq.s32.totalorder %s18, 1
    %p36 = por %p34, %p35
    %p37 = scmp.ne.s32.totalorder %s26, %s27
    %p38 = scmp.eq.s32.totalorder %s18, 0
    %p39 = por %p37, %p38
    %p40 = scmp.ne.s32.totalorder %s26, %s27
    %p41 = scmp.eq.s32.totalorder %s19, 1
    %p42 = por %p40, %p41
    %p44 = scmp.ne.s32.totalorder %s27, %s43
    %p45 = scmp.eq.s32.totalorder %s19, 0
    %p46 = por %p44, %p45
    %s47 = ssub.s32 %s13, %s20
    %p48 = scmp.eq.s32.totalorder %s47, 0
    %s50 = sadd.s32 %s49, 1
    %s51 = scalar_select %p48, %s49, %s50
    %p54 = pneg %p48
    %p55 = scmp.eq.s32.totalorder %s13, 1
    %p56 = por %p54, %p55
    %p57 = scmp.ne.s32.totalorder %s49, %s52
    %p58 = scmp.eq.s32.totalorder %s13, 0
    %p59 = por %p57, %p58
    %p60 = scmp.ne.s32.totalorder %s49, %s52
    %p61 = scmp.eq.s32.totalorder %s18, 1
    %p62 = por %p60, %p61
    %p63 = scmp.ne.s32.totalorder %s52, %s53
    %p64 = scmp.eq.s32.totalorder %s18, 0
    %p65 = por %p63, %p64
    %p66 = scmp.ne.s32.totalorder %s52, %s53
    %p67 = scmp.eq.s32.totalorder %s19, 1
    %p68 = por %p66, %p67
    %p70 = scmp.ne.s32.totalorder %s53, %s69
    %p71 = scmp.eq.s32.totalorder %s19, 0
    %p72 = por %p70, %p71
    %s73 = ssub.s32 %s13, %s20
    %p74 = scmp.eq.s32.totalorder %s73, 0
    %s76 = sadd.s32 %s75, 1
    %s77 = scalar_select %p74, %s75, %s76
    %p80 = pneg %p74
    %p81 = scmp.eq.s32.totalorder %s13, 1
    %p82 = por %p80, %p81
    %p83 = scmp.ne.s32.totalorder %s75, %s78
    %p84 = scmp.eq.s32.totalorder %s13, 0
    %p85 = por %p83, %p84
    %p86 = scmp.ne.s32.totalorder %s75, %s78
    %p87 = scmp.eq.s32.totalorder %s18, 1
    %p88 = por %p86, %p87
    %p89 = scmp.ne.s32.totalorder %s78, %s79
    %p90 = scmp.eq.s32.totalorder %s18, 0
    %p91 = por %p89, %p90
    %p92 = scmp.ne.s32.totalorder %s78, %s79
    %p93 = scmp.eq.s32.totalorder %s19, 1
    %p94 = por %p92, %p93
    %p96 = scmp.ne.s32.totalorder %s79, %s95
    %p97 = scmp.eq.s32.totalorder %s19, 0
    %p98 = por %p96, %p97
    %s99 = ssub.s32 %s13, %s20
    %p100 = scmp.eq.s32.totalorder %s99, 0
    %s102 = sadd.s32 %s101, 1
    %s103 = scalar_select %p100, %s101, %s102
    %p106 = pneg %p100
    %p107 = scmp.eq.s32.totalorder %s13, 1
    %p108 = por %p106, %p107
    %p109 = scmp.ne.s32.totalorder %s101, %s104
    %p110 = scmp.eq.s32.totalorder %s13, 0
    %p111 = por %p109, %p110
    %p112 = scmp.ne.s32.totalorder %s101, %s104
    %p113 = scmp.eq.s32.totalorder %s18, 1
    %p114 = por %p112, %p113
    %p115 = scmp.ne.s32.totalorder %s104, %s105
    %p116 = scmp.eq.s32.totalorder %s18, 0
    %p117 = por %p115, %p116
    %p118 = scmp.ne.s32.totalorder %s104, %s105
    %p119 = scmp.eq.s32.totalorder %s19, 1
    %p120 = por %p118, %p119
    %p122 = scmp.ne.s32.totalorder %s105, %s121
    %p123 = scmp.eq.s32.totalorder %s19, 0
    %p124 = por %p122, %p123
    %s126 = sadd.s32 %s125, 1
    %p129 = scmp.eq.s32.totalorder %s13, 1
    %p130 = scmp.ne.s32.totalorder %s125, %s127
    %p131 = scmp.eq.s32.totalorder %s13, 0
    %p132 = por %p130, %p131
    %p133 = scmp.ne.s32.totalorder %s125, %s127
    %p134 = scmp.eq.s32.totalorder %s18, 1
    %p135 = por %p133, %p134
    %p136 = scmp.ne.s32.totalorder %s127, %s128
    %p137 = scmp.eq.s32.totalorder %s18, 0
    %p138 = por %p136, %p137
    %p139 = scmp.ne.s32.totalorder %s127, %s128
    %p140 = scmp.eq.s32.totalorder %s19, 1
    %p141 = por %p139, %p140
    %p143 = scmp.ne.s32.totalorder %s128, %s142
    %p144 = scmp.eq.s32.totalorder %s19, 0
    %p145 = por %p143, %p144
    %s147 = sadd.s32 %s146, 1
    %p150 = scmp.eq.s32.totalorder %s13, 1
    %p151 = scmp.ne.s32.totalorder %s146, %s148
    %p152 = scmp.eq.s32.totalorder %s13, 0
    %p153 = por %p151, %p152
    %p154 = scmp.ne.s32.totalorder %s146, %s148
    %p155 = scmp.eq.s32.totalorder %s18, 1
    %p156 = por %p154, %p155
    %p157 = scmp.ne.s32.totalorder %s148, %s149
    %p158 = scmp.eq.s32.totalorder %s18, 0
    %p159 = por %p157, %p158
    %p160 = scmp.ne.s32.totalorder %s148, %s149
    %p161 = scmp.eq.s32.totalorder %s19, 1
    %p162 = por %p160, %p161
    %p164 = scmp.ne.s32.totalorder %s149, %s163
    %p165 = scmp.eq.s32.totalorder %s19, 0
    %p166 = por %p164, %p165
    %s168 = sadd.s32 %s167, 1
    %p171 = scmp.eq.s32.totalorder %s13, 1
    %p172 = scmp.ne.s32.totalorder %s167, %s169
    %p173 = scmp.eq.s32.totalorder %s13, 0
    %p174 = por %p172, %p173
    %p175 = scmp.ne.s32.totalorder %s167, %s169
    %p176 = scmp.eq.s32.totalorder %s18, 1
    %p177 = por %p175, %p176
    %p178 = scmp.ne.s32.totalorder %s169, %s170
    %p179 = scmp.eq.s32.totalorder %s18, 0
    %p180 = por %p178, %p179
    %p181 = scmp.ne.s32.totalorder %s169, %s170
    %p182 = scmp.eq.s32.totalorder %s19, 1
    %p183 = por %p181, %p182
    %p185 = scmp.ne.s32.totalorder %s170, %s184
    %p186 = scmp.eq.s32.totalorder %s19, 0
    %p187 = por %p185, %p186
    %s188 = ssub.s32 %s13, %s20
    %p189 = scmp.eq.s32.totalorder %s188, 0
    %s191 = sadd.s32 %s190, 1
    %s192 = scalar_select %p189, %s190, %s191
    %p195 = pneg %p189
    %p196 = scmp.eq.s32.totalorder %s13, 1
    %p197 = por %p195, %p196
    %p198 = scmp.ne.s32.totalorder %s190, %s193
    %p199 = scmp.eq.s32.totalorder %s13, 0
    %p200 = por %p198, %p199
    %p201 = scmp.ne.s32.totalorder %s190, %s193
    %p202 = scmp.eq.s32.totalorder %s18, 1
    %p203 = por %p201, %p202
    %p204 = scmp.ne.s32.totalorder %s193, %s194
    %p205 = scmp.eq.s32.totalorder %s18, 0
    %p206 = por %p204, %p205
    %p207 = scmp.ne.s32.totalorder %s193, %s194
    %p208 = scmp.eq.s32.totalorder %s19, 1
    %p209 = por %p207, %p208
    %p211 = scmp.ne.s32.totalorder %s194, %s210
    %p212 = scmp.eq.s32.totalorder %s19, 0
    %p213 = por %p211, %p212
    %p214 = scmp.le.s32.totalorder 1, %s13
    %p215 = scmp.lt.s32.totalorder %s13, 3
    %p216 = pnand %p214, %p215
    %p217 = pneg %p216
    // Predicated region
    $region9: #{tpu_custom_call.1} parent=5 // pred_check
      _
    $region10: #{tpu_custom_call.1} parent=5 // pred_check_branch
      %219 = sbr.rel (%p216) target = $region12
    $region11: #{tpu_custom_call.1} parent=5 // pred_region
      %s220 = ssub.s32 %s13, 1
      // Predicated region
      $region13: #{tpu_custom_call.1} parent=11 // pred_check
        %p221 = pneg %p138
      $region14: #{tpu_custom_call.1} parent=11 // pred_check_branch
        %223 = sbr.rel (%p221) target = $region16
      $region15: #{tpu_custom_call.1} parent=11 // pred_region
        _
      $region16: #{tpu_custom_call.1} parent=11 // pred_fallthru
        _
      // Predicated region
      $region17: #{tpu_custom_call.1} parent=11 // pred_check
        %p224 = pneg %p159
      $region18: #{tpu_custom_call.1} parent=11 // pred_check_branch
        %226 = sbr.rel (%p224) target = $region20
      $region19: #{tpu_custom_call.1} parent=11 // pred_region
        _
      $region20: #{tpu_custom_call.1} parent=11 // pred_fallthru
        _
      // Predicated region
      $region21: #{tpu_custom_call.1} parent=11 // pred_check
        %p227 = pneg %p180
      $region22: #{tpu_custom_call.1} parent=11 // pred_check_branch
        %229 = sbr.rel (%p227) target = $region24
      $region23: #{tpu_custom_call.1} parent=11 // pred_region
        _
      $region24: #{tpu_custom_call.1} parent=11 // pred_fallthru
        _
    $region12: #{tpu_custom_call.1} parent=5 // pred_fallthru
      _
    %p230 = scmp.lt.s32.totalorder %s13, 2
    // Predicated region
    $region25: #{tpu_custom_call.1} parent=5 // pred_check
      %p231 = pneg %p230
    $region26: #{tpu_custom_call.1} parent=5 // pred_check_branch
      %233 = sbr.rel (%p231) target = $region28
    $region27: #{tpu_custom_call.1} parent=5 // pred_region
      // Predicated region
      $region29: #{tpu_custom_call.1} parent=27 // pred_check
        %p234 = pneg %p33
      $region30: #{tpu_custom_call.1} parent=27 // pred_check_branch
        %236 = sbr.rel (%p234) target = $region32
      $region31: #{tpu_custom_call.1} parent=27 // pred_region
        %s237 = smul.u32 16, %s13
        %p238 = scmp.lt.s32.totalorder %s237, 31
        %s239 = scalar_select %p238, %s237, 31
        %s240 = smul.addr %s239, 8
        %s241 = scalar_lea.vmem %s0, %s240
        %s242 = smul.u32 16, %s13
      $region32: #{tpu_custom_call.1} parent=27 // pred_fallthru
        _
      // Predicated region
      $region33: #{tpu_custom_call.1} parent=27 // pred_check
        %p243 = pneg %p59
      $region34: #{tpu_custom_call.1} parent=27 // pred_check_branch
        %245 = sbr.rel (%p243) target = $region36
      $region35: #{tpu_custom_call.1} parent=27 // pred_region
        %s246 = smul.u32 16, %s13
        %p247 = scmp.lt.s32.totalorder %s246, 31
        %s248 = scalar_select %p247, %s246, 31
        %s249 = smul.addr %s248, 8
        %s250 = scalar_lea.vmem %s1, %s249
        %s251 = smul.u32 16, %s13
      $region36: #{tpu_custom_call.1} parent=27 // pred_fallthru
        _
      // Predicated region
      $region37: #{tpu_custom_call.1} parent=27 // pred_check
        %p252 = pneg %p85
      $region38: #{tpu_custom_call.1} parent=27 // pred_check_branch
        %254 = sbr.rel (%p252) target = $region40
      $region39: #{tpu_custom_call.1} parent=27 // pred_region
        %s255 = smul.u32 16, %s13
        %p256 = scmp.lt.s32.totalorder %s255, 31
        %s257 = scalar_select %p256, %s255, 31
        %s258 = smul.addr %s257, 8
        %s259 = scalar_lea.vmem %s2, %s258
        %s260 = smul.u32 16, %s13
      $region40: #{tpu_custom_call.1} parent=27 // pred_fallthru
        _
      // Predicated region
      $region41: #{tpu_custom_call.1} parent=27 // pred_check
        %p261 = pneg %p111
      $region42: #{tpu_custom_call.1} parent=27 // pred_check_branch
        %263 = sbr.rel (%p261) target = $region44
      $region43: #{tpu_custom_call.1} parent=27 // pred_region
        %s264 = smul.u32 16, %s13
        %p265 = scmp.lt.s32.totalorder %s264, 31
        %s266 = scalar_select %p265, %s264, 31
        %s267 = smul.addr %s266, 8
        %s268 = scalar_lea.vmem %s3, %s267
        %s269 = smul.u32 16, %s13
      $region44: #{tpu_custom_call.1} parent=27 // pred_fallthru
        _
    $region28: #{tpu_custom_call.1} parent=5 // pred_fallthru
      _
    %p270 = scmp.le.s32.totalorder 1, %s13
    %p271 = scmp.lt.s32.totalorder %s13, 3
    %p272 = pnand %p270, %p271
    %p273 = pneg %p272
    // Predicated region
    $region45: #{tpu_custom_call.1} parent=5 // pred_check
      _
    $region46: #{tpu_custom_call.1} parent=5 // pred_check_branch
      %275 = sbr.rel (%p272) target = $region48
    $region47: #{tpu_custom_call.1} parent=5 // pred_region
      %s276 = ssub.s32 %s13, 1
      %s277 = smul.u32 16, %s18
      %p278 = scmp.lt.s32.totalorder %s277, 31
      %s279 = scalar_select %p278, %s277, 31
      %s280 = smul.addr %s279, 8
      %s281 = scalar_lea.vmem %s0, %s280
      %p282 = pneg %p39
      %p283 = pneg %p36
      %s284 = smul.u32 16, %s18
      %p285 = scmp.lt.s32.totalorder %s284, 31
      %s286 = scalar_select %p285, %s284, 31
      %s287 = smul.addr %s286, 8
      %s288 = scalar_lea.vmem %s1, %s287
      %p289 = pneg %p65
      %p290 = pneg %p62
      %s291 = smul.u32 16, %s18
      %p292 = scmp.lt.s32.totalorder %s291, 31
      %s293 = scalar_select %p292, %s291, 31
      %s294 = smul.addr %s293, 8
      %s295 = scalar_lea.vmem %s2, %s294
      %p296 = pneg %p91
      %p297 = pneg %p88
      %s298 = smul.u32 16, %s18
      %p299 = scmp.lt.s32.totalorder %s298, 31
      %s300 = scalar_select %p299, %s298, 31
      %s301 = smul.addr %s300, 8
      %s302 = scalar_lea.vmem %s3, %s301
      %p303 = pneg %p117
      %p304 = pneg %p114
      %p305 = pneg %p138
      %p306 = pneg %p135
      %p307 = pneg %p159
      %p308 = pneg %p156
      %p309 = pneg %p180
      %p310 = pneg %p177
      %p311 = pneg %p206
      %p312 = pneg %p203
      %s313 = smul.u32 16, %s18
      %p314 = scmp.lt.s32.totalorder %s313, 31
      %s315 = scalar_select %p314, %s313, 31
      %s316 = smul.addr %s315, 8
      %s317 = scalar_lea.vmem %s7, %s316
      %s318 = smul.u32 16, %s18
      %p319 = scmp.lt.s32.totalorder %s318, 31
      %s320 = scalar_select %p319, %s318, 31
      %s321 = smul.addr %s320, 8
      %s322 = scalar_lea.vmem %s0, %s321
      %s323 = smul.u32 16, %s18
      %s324 = smul.u32 16, %s18
      %p325 = scmp.lt.s32.totalorder %s324, 31
      %s326 = scalar_select %p325, %s324, 31
      %s327 = smul.addr %s326, 8
      %s328 = scalar_lea.vmem %s1, %s327
      %s329 = smul.u32 16, %s18
      %s330 = smul.u32 16, %s18
      %p331 = scmp.lt.s32.totalorder %s330, 31
      %s332 = scalar_select %p331, %s330, 31
      %s333 = smul.addr %s332, 8
      %s334 = scalar_lea.vmem %s2, %s333
      %s335 = smul.u32 16, %s18
      %s336 = smul.u32 16, %s18
      %p337 = scmp.lt.s32.totalorder %s336, 31
      %s338 = scalar_select %p337, %s336, 31
      %s339 = smul.addr %s338, 8
      %s340 = scalar_lea.vmem %s3, %s339
      %s341 = smul.u32 16, %s18
      %s342 = smul.u32 16, %s18
      %p343 = scmp.lt.s32.totalorder %s342, 31
      %s344 = scalar_select %p343, %s342, 31
      %s345 = smul.addr %s344, 8
      %s346 = scalar_lea.vmem %s7, %s345
      %s347 = smul.u32 16, %s18
      %v348 = vld [vmem:[%s6] sm:$0x1]
      %v349 = vld [vmem:[%s6 + $0x1] sm:$0x1]
      %v350 = vld [vmem:[%s6 + $0x2] sm:$0x1]
      %v351 = vld [vmem:[%s6 + $0x3] sm:$0x1]
      %v352 = vld [vmem:[%s322] sm:$0xff]
      %v353 = vld [vmem:[%s322 + $0x8] sm:$0xff]
      %v354 = vld [vmem:[%s322 + $0x10] sm:$0xff]
      %v355 = vld [vmem:[%s322 + $0x18] sm:$0xff]
      %v356 = vld [vmem:[%s322 + $0x20] sm:$0xff]
      %v357 = vld [vmem:[%s322 + $0x28] sm:$0xff]
      %v358 = vld [vmem:[%s322 + $0x30] sm:$0xff]
      %v359 = vld [vmem:[%s322 + $0x38] sm:$0xff]
      %v360 = vld [vmem:[%s322 + $0x40] sm:$0xff]
      %v361 = vld [vmem:[%s322 + $0x48] sm:$0xff]
      %v362 = vld [vmem:[%s322 + $0x50] sm:$0xff]
      %v363 = vld [vmem:[%s322 + $0x58] sm:$0xff]
      %v364 = vld [vmem:[%s322 + $0x60] sm:$0xff]
      %v365 = vld [vmem:[%s322 + $0x68] sm:$0xff]
      %v366 = vld [vmem:[%s322 + $0x70] sm:$0xff]
      %v367 = vld [vmem:[%s322 + $0x78] sm:$0xff]
      %v368 = vld [vmem:[%s4] sm:$0x3f]
      %v369 = vld [vmem:[%s328] sm:$0xff]
      %v370 = vld [vmem:[%s328 + $0x8] sm:$0xff]
      %v371 = vld [vmem:[%s328 + $0x10] sm:$0xff]
      %v372 = vld [vmem:[%s328 + $0x18] sm:$0xff]
      %v373 = vld [vmem:[%s328 + $0x20] sm:$0xff]
      %v374 = vld [vmem:[%s328 + $0x28] sm:$0xff]
      %v375 = vld [vmem:[%s328 + $0x30] sm:$0xff]
      %v376 = vld [vmem:[%s328 + $0x38] sm:$0xff]
      %v377 = vld [vmem:[%s328 + $0x40] sm:$0xff]
      %v378 = vld [vmem:[%s328 + $0x48] sm:$0xff]
      %v379 = vld [vmem:[%s328 + $0x50] sm:$0xff]
      %v380 = vld [vmem:[%s328 + $0x58] sm:$0xff]
      %v381 = vld [vmem:[%s328 + $0x60] sm:$0xff]
      %v382 = vld [vmem:[%s328 + $0x68] sm:$0xff]
      %v383 = vld [vmem:[%s328 + $0x70] sm:$0xff]
      %v384 = vld [vmem:[%s328 + $0x78] sm:$0xff]
      %v385 = vld [vmem:[%s4 + $0x6] sm:$0x3f]
      %vm386 = vcmask 48128
      %v388 = vsel %vm386, %v369, 0
      %v391 = vsel %vm386, %v370, 0
      %v394 = vsel %vm386, %v371, 0
      %v397 = vsel %vm386, %v372, 0
      %v400 = vsel %vm386, %v373, 0
      %v403 = vsel %vm386, %v374, 0
      %v406 = vsel %vm386, %v375, 0
      %v409 = vsel %vm386, %v376, 0
      %v412 = vsel %vm386, %v377, 0
      %v415 = vsel %vm386, %v378, 0
      %v418 = vsel %vm386, %v379, 0
      %v421 = vsel %vm386, %v380, 0
      %v424 = vsel %vm386, %v381, 0
      %v427 = vsel %vm386, %v382, 0
      %v430 = vsel %vm386, %v383, 0
      %v433 = vsel %vm386, %v384, 0
      %vm435 = vcmask 1045504
      %v437 = vsel %vm435, %v385, 0
      %439 = vmatprep.subr.mxu0 0.0
      %440 = vmatpush1.msra.mxu0 %v437
      %441 = vmatprep.subr.mxu0 0.0
      %442 = vmatpush1.msra.mxu0 0.0
      %443 = vmatprep.subr.mxu0 0.0
      %444 = vmatpush1.msra.mxu0 0.0
      %445 = vmatprep.subr.mxu0 0.0
      %446 = vmatpush1.msra.mxu0 0.0
      %447 = vmatprep.subr.mxu0 0.0
      %448 = vmatpush1.msra.mxu0 0.0
      %449 = vmatprep.subr.mxu0 0.0
      %450 = vmatpush1.msra.mxu0 0.0
      %451 = vmatprep.subr.mxu0 0.0
      %452 = vmatpush1.msra.mxu0 0.0
      %453 = vmatprep.subr.mxu0 0.0
      %454 = vmatpush1.msra.mxu0 0.0
      %455 = vmatprep.subr.mxu0 0.0
      %456 = vmatpush1.msra.mxu0 0.0
      %457 = vmatprep.subr.mxu0 0.0
      %458 = vmatpush1.msra.mxu0 0.0
      %459 = vmatprep.subr.mxu0 0.0
      %460 = vmatpush1.msra.mxu0 0.0
      %461 = vmatprep.subr.mxu0 0.0
      %462 = vmatpush1.msra.mxu0 0.0
      %463 = vmatprep.subr.mxu0 0.0
      %464 = vmatpush1.msra.mxu0 0.0
      %465 = vmatprep.subr.mxu0 0.0
      %466 = vmatpush1.msra.mxu0 0.0
      %467 = vmatprep.subr.mxu0 0.0
      %468 = vmatpush1.msra.mxu0 0.0
      %469 = vmatprep.subr.mxu0 0.0
      %470 = vmatpush1.msra.mxu0 0.0
      %471 = vmatprep.subr.mxu0 0.0
      %472 = vmatpush1.msra.mxu0 0.0
      %473 = vmatprep.subr.mxu0 0.0
      %474 = vmatpush1.msra.mxu0 0.0
      %475 = vmatprep.subr.mxu0 0.0
      %476 = vmatpush1.msra.mxu0 0.0
      %477 = vmatprep.subr.mxu0 0.0
      %478 = vmatpush1.msra.mxu0 0.0
      %479 = vmatprep.subr.mxu0 0.0
      %480 = vmatpush1.msra.mxu0 0.0
      %481 = vmatprep.subr.mxu0 0.0
      %482 = vmatpush1.msra.mxu0 0.0
      %483 = vmatprep.subr.mxu0 0.0
      %484 = vmatpush1.msra.mxu0 0.0
      %485 = vmatprep.subr.mxu0 0.0
      %486 = vmatpush1.msra.mxu0 0.0
      %487 = vmatprep.subr.mxu0 0.0
      %488 = vmatpush1.msra.mxu0 0.0
      %489 = vmatprep.subr.mxu0 0.0
      %490 = vmatpush1.msra.mxu0 0.0
      %491 = vmatprep.subr.mxu0 0.0
      %492 = vmatpush1.msra.mxu0 0.0
      %493 = vmatprep.subr.mxu0 0.0
      %494 = vmatpush1.msra.mxu0 0.0
      %495 = vmatprep.subr.mxu0 0.0
      %496 = vmatpush1.msra.mxu0 0.0
      %497 = vmatprep.subr.mxu0 0.0
      %498 = vmatpush1.msra.mxu0 0.0
      %499 = vmatprep.subr.mxu0 0.0
      %500 = vmatpush1.msra.mxu0 0.0
      %501 = vmatprep.subr.mxu0 0.0
      %502 = vmatpush1.msra.mxu0 0.0
      %503 = vmatprep.mubr.f32.mxu0 0.0
      %504 = vmatmul.mubr.f32.gmra.mrb[0].mxu0 %v388
      %v505 = vpop.f32.mrb[0].mxu0
      %v506 = vadd.f32 0.0, %v505
      %v507 = vpop.f32.mrb[0].mxu0
      %508 = vmatprep.mubr.f32.mxu0 0.0
      %509 = vmatmul.mubr.f32.gmra.mrb[0].mxu0 %v391
      %v510 = vpop.f32.mrb[0].mxu0
      %v511 = vadd.f32 0.0, %v510
      %v512 = vpop.f32.mrb[0].mxu0
      %513 = vmatprep.mubr.f32.mxu0 0.0
      %514 = vmatmul.mubr.f32.gmra.mrb[0].mxu0 %v394
      %v515 = vpop.f32.mrb[0].mxu0
      %v516 = vadd.f32 0.0, %v515
      %v517 = vpop.f32.mrb[0].mxu0
      %518 = vmatprep.mubr.f32.mxu0 0.0
      %519 = vmatmul.mubr.f32.gmra.mrb[0].mxu0 %v397
      %v520 = vpop.f32.mrb[0].mxu0
      %v521 = vadd.f32 0.0, %v520
      %v522 = vpop.f32.mrb[0].mxu0
      %523 = vmatprep.mubr.f32.mxu0 0.0
      %524 = vmatmul.mubr.f32.gmra.mrb[0].mxu0 %v400
      %v525 = vpop.f32.mrb[0].mxu0
      %v526 = vadd.f32 0.0, %v525
      %v527 = vpop.f32.mrb[0].mxu0
      %528 = vmatprep.mubr.f32.mxu0 0.0
      %529 = vmatmul.mubr.f32.gmra.mrb[0].mxu0 %v403
      %v530 = vpop.f32.mrb[0].mxu0
      %v531 = vadd.f32 0.0, %v530
      %v532 = vpop.f32.mrb[0].mxu0
      %533 = vmatprep.mubr.f32.mxu0 0.0
      %534 = vmatmul.mubr.f32.gmra.mrb[0].mxu0 %v406
      %v535 = vpop.f32.mrb[0].mxu0
      %v536 = vadd.f32 0.0, %v535
      %v537 = vpop.f32.mrb[0].mxu0
      %538 = vmatprep.mubr.f32.mxu0 0.0
      %539 = vmatmul.mubr.f32.gmra.mrb[0].mxu0 %v409
      %v540 = vpop.f32.mrb[0].mxu0
      %v541 = vadd.f32 0.0, %v540
      %v542 = vpop.f32.mrb[0].mxu0
      %543 = vmatprep.mubr.f32.mxu0 0.0
      %544 = vmatmul.mubr.f32.gmra.mrb[0].mxu0 %v412
      %v545 = vpop.f32.mrb[0].mxu0
      %v546 = vadd.f32 0.0, %v545
      %v547 = vpop.f32.mrb[0].mxu0
      %548 = vmatprep.mubr.f32.mxu0 0.0
      %549 = vmatmul.mubr.f32.gmra.mrb[0].mxu0 %v415
      %v550 = vpop.f32.mrb[0].mxu0
      %v551 = vadd.f32 0.0, %v550
      %v552 = vpop.f32.mrb[0].mxu0
      %553 = vmatprep.mubr.f32.mxu0 0.0
      %554 = vmatmul.mubr.f32.gmra.mrb[0].mxu0 %v418
      %v555 = vpop.f32.mrb[0].mxu0
      %v556 = vadd.f32 0.0, %v555
      %v557 = vpop.f32.mrb[0].mxu0
      %558 = vmatprep.mubr.f32.mxu0 0.0
      %559 = vmatmul.mubr.f32.gmra.mrb[0].mxu0 %v421
      %v560 = vpop.f32.mrb[0].mxu0
      %v561 = vadd.f32 0.0, %v560
      %v562 = vpop.f32.mrb[0].mxu0
      %563 = vmatprep.mubr.f32.mxu0 0.0
      %564 = vmatmul.mubr.f32.gmra.mrb[0].mxu0 %v424
      %v565 = vpop.f32.mrb[0].mxu0
      %v566 = vadd.f32 0.0, %v565
      %v567 = vpop.f32.mrb[0].mxu0
      %568 = vmatprep.mubr.f32.mxu0 0.0
      %569 = vmatmul.mubr.f32.gmra.mrb[0].mxu0 %v427
      %v570 = vpop.f32.mrb[0].mxu0
      %v571 = vadd.f32 0.0, %v570
      %v572 = vpop.f32.mrb[0].mxu0
      %573 = vmatprep.mubr.f32.mxu0 0.0
      %574 = vmatmul.mubr.f32.gmra.mrb[0].mxu0 %v430
      %v575 = vpop.f32.mrb[0].mxu0
      %v576 = vadd.f32 0.0, %v575
      %v577 = vpop.f32.mrb[0].mxu0
      %578 = vmatprep.mubr.f32.mxu0 0.0
      %579 = vmatmul.mubr.f32.gmra.mrb[0].mxu0 %v433
      %v580 = vpop.f32.mrb[0].mxu0
      %v581 = vadd.f32 0.0, %v580
      %v582 = vpop.f32.mrb[0].mxu0
      %583 = vdwg.mxu0
      %v585 = vsel %vm386, %v352, 0
      %v588 = vsel %vm386, %v353, 0
      %v591 = vsel %vm386, %v354, 0
      %v594 = vsel %vm386, %v355, 0
      %v597 = vsel %vm386, %v356, 0
      %v600 = vsel %vm386, %v357, 0
      %v603 = vsel %vm386, %v358, 0
      %v606 = vsel %vm386, %v359, 0
      %v609 = vsel %vm386, %v360, 0
      %v612 = vsel %vm386, %v361, 0
      %v615 = vsel %vm386, %v362, 0
      %v618 = vsel %vm386, %v363, 0
      %v621 = vsel %vm386, %v364, 0
      %v624 = vsel %vm386, %v365, 0
      %v627 = vsel %vm386, %v366, 0
      %v630 = vsel %vm386, %v367, 0
      %v633 = vsel %vm435, %v368, 0
      %635 = vmatprep.subr.mxu0 0.0
      %636 = vmatpush1.msra.mxu0 %v633
      %637 = vmatprep.subr.mxu0 0.0
      %638 = vmatpush1.msra.mxu0 0.0
      %639 = vmatprep.subr.mxu0 0.0
      %640 = vmatpush1.msra.mxu0 0.0
      %641 = vmatprep.subr.mxu0 0.0
      %642 = vmatpush1.msra.mxu0 0.0
      %643 = vmatprep.subr.mxu0 0.0
      %644 = vmatpush1.msra.mxu0 0.0
      %645 = vmatprep.subr.mxu0 0.0
      %646 = vmatpush1.msra.mxu0 0.0
      %647 = vmatprep.subr.mxu0 0.0
      %648 = vmatpush1.msra.mxu0 0.0
      %649 = vmatprep.subr.mxu0 0.0
      %650 = vmatpush1.msra.mxu0 0.0
      %651 = vmatprep.subr.mxu0 0.0
      %652 = vmatpush1.msra.mxu0 0.0
      %653 = vmatprep.subr.mxu0 0.0
      %654 = vmatpush1.msra.mxu0 0.0
      %655 = vmatprep.subr.mxu0 0.0
      %656 = vmatpush1.msra.mxu0 0.0
      %657 = vmatprep.subr.mxu0 0.0
      %658 = vmatpush1.msra.mxu0 0.0
      %659 = vmatprep.subr.mxu0 0.0
      %660 = vmatpush1.msra.mxu0 0.0
      %661 = vmatprep.subr.mxu0 0.0
      %662 = vmatpush1.msra.mxu0 0.0
      %663 = vmatprep.subr.mxu0 0.0
      %664 = vmatpush1.msra.mxu0 0.0
      %665 = vmatprep.subr.mxu0 0.0
      %666 = vmatpush1.msra.mxu0 0.0
      %667 = vmatprep.subr.mxu0 0.0
      %668 = vmatpush1.msra.mxu0 0.0
      %669 = vmatprep.subr.mxu0 0.0
      %670 = vmatpush1.msra.mxu0 0.0
      %671 = vmatprep.subr.mxu0 0.0
      %672 = vmatpush1.msra.mxu0 0.0
      %673 = vmatprep.subr.mxu0 0.0
      %674 = vmatpush1.msra.mxu0 0.0
      %675 = vmatprep.subr.mxu0 0.0
      %676 = vmatpush1.msra.mxu0 0.0
      %677 = vmatprep.subr.mxu0 0.0
      %678 = vmatpush1.msra.mxu0 0.0
      %679 = vmatprep.subr.mxu0 0.0
      %680 = vmatpush1.msra.mxu0 0.0
      %681 = vmatprep.subr.mxu0 0.0
      %682 = vmatpush1.msra.mxu0 0.0
      %683 = vmatprep.subr.mxu0 0.0
      %684 = vmatpush1.msra.mxu0 0.0
      %685 = vmatprep.subr.mxu0 0.0
      %686 = vmatpush1.msra.mxu0 0.0
      %687 = vmatprep.subr.mxu0 0.0
      %688 = vmatpush1.msra.mxu0 0.0
      %689 = vmatprep.subr.mxu0 0.0
      %690 = vmatpush1.msra.mxu0 0.0
      %691 = vmatprep.subr.mxu0 0.0
      %692 = vmatpush1.msra.mxu0 0.0
      %693 = vmatprep.subr.mxu0 0.0
      %694 = vmatpush1.msra.mxu0 0.0
      %695 = vmatprep.subr.mxu0 0.0
      %696 = vmatpush1.msra.mxu0 0.0
      %697 = vmatprep.subr.mxu0 0.0
      %698 = vmatpush1.msra.mxu0 0.0
      %699 = vmatprep.mubr.f32.mxu0 0.0
      %700 = vmatmul.mubr.f32.gmra.mrb[0].mxu0 %v585
      %v701 = vpop.f32.mrb[0].mxu0
      %v702 = vadd.f32 %v506, %v701
      %v703 = vpop.f32.mrb[0].mxu0
      %704 = vmatprep.mubr.f32.mxu0 0.0
      %705 = vmatmul.mubr.f32.gmra.mrb[0].mxu0 %v588
      %v706 = vpop.f32.mrb[0].mxu0
      %v707 = vadd.f32 %v511, %v706
      %v708 = vpop.f32.mrb[0].mxu0
      %709 = vmatprep.mubr.f32.mxu0 0.0
      %710 = vmatmul.mubr.f32.gmra.mrb[0].mxu0 %v591
      %v711 = vpop.f32.mrb[0].mxu0
      %v712 = vadd.f32 %v516, %v711
      %v713 = vpop.f32.mrb[0].mxu0
      %714 = vmatprep.mubr.f32.mxu0 0.0
      %715 = vmatmul.mubr.f32.gmra.mrb[0].mxu0 %v594
      %v716 = vpop.f32.mrb[0].mxu0
      %v717 = vadd.f32 %v521, %v716
      %v718 = vpop.f32.mrb[0].mxu0
      %719 = vmatprep.mubr.f32.mxu0 0.0
      %720 = vmatmul.mubr.f32.gmra.mrb[0].mxu0 %v597
      %v721 = vpop.f32.mrb[0].mxu0
      %v722 = vadd.f32 %v526, %v721
      %v723 = vpop.f32.mrb[0].mxu0
      %724 = vmatprep.mubr.f32.mxu0 0.0
      %725 = vmatmul.mubr.f32.gmra.mrb[0].mxu0 %v600
      %v726 = vpop.f32.mrb[0].mxu0
      %v727 = vadd.f32 %v531, %v726
      %v728 = vpop.f32.mrb[0].mxu0
      %729 = vmatprep.mubr.f32.mxu0 0.0
      %730 = vmatmul.mubr.f32.gmra.mrb[0].mxu0 %v603
      %v731 = vpop.f32.mrb[0].mxu0
      %v732 = vadd.f32 %v536, %v731
      %v733 = vpop.f32.mrb[0].mxu0
      %734 = vmatprep.mubr.f32.mxu0 0.0
      %735 = vmatmul.mubr.f32.gmra.mrb[0].mxu0 %v606
      %v736 = vpop.f32.mrb[0].mxu0
      %v737 = vadd.f32 %v541, %v736
      %v738 = vpop.f32.mrb[0].mxu0
      %739 = vmatprep.mubr.f32.mxu0 0.0
      %740 = vmatmul.mubr.f32.gmra.mrb[0].mxu0 %v609
      %v741 = vpop.f32.mrb[0].mxu0
      %v742 = vadd.f32 %v546, %v741
      %v743 = vpop.f32.mrb[0].mxu0
      %744 = vmatprep.mubr.f32.mxu0 0.0
      %745 = vmatmul.mubr.f32.gmra.mrb[0].mxu0 %v612
      %v746 = vpop.f32.mrb[0].mxu0
      %v747 = vadd.f32 %v551, %v746
      %v748 = vpop.f32.mrb[0].mxu0
      %749 = vmatprep.mubr.f32.mxu0 0.0
      %750 = vmatmul.mubr.f32.gmra.mrb[0].mxu0 %v615
      %v751 = vpop.f32.mrb[0].mxu0
      %v752 = vadd.f32 %v556, %v751
      %v753 = vpop.f32.mrb[0].mxu0
      %754 = vmatprep.mubr.f32.mxu0 0.0
      %755 = vmatmul.mubr.f32.gmra.mrb[0].mxu0 %v618
      %v756 = vpop.f32.mrb[0].mxu0
      %v757 = vadd.f32 %v561, %v756
      %v758 = vpop.f32.mrb[0].mxu0
      %759 = vmatprep.mubr.f32.mxu0 0.0
      %760 = vmatmul.mubr.f32.gmra.mrb[0].mxu0 %v621
      %v761 = vpop.f32.mrb[0].mxu0
      %v762 = vadd.f32 %v566, %v761
      %v763 = vpop.f32.mrb[0].mxu0
      %764 = vmatprep.mubr.f32.mxu0 0.0
      %765 = vmatmul.mubr.f32.gmra.mrb[0].mxu0 %v624
      %v766 = vpop.f32.mrb[0].mxu0
      %v767 = vadd.f32 %v571, %v766
      %v768 = vpop.f32.mrb[0].mxu0
      %769 = vmatprep.mubr.f32.mxu0 0.0
      %770 = vmatmul.mubr.f32.gmra.mrb[0].mxu0 %v627
      %v771 = vpop.f32.mrb[0].mxu0
      %v772 = vadd.f32 %v576, %v771
      %v773 = vpop.f32.mrb[0].mxu0
      %774 = vmatprep.mubr.f32.mxu0 0.0
      %775 = vmatmul.mubr.f32.gmra.mrb[0].mxu0 %v630
      %v776 = vpop.f32.mrb[0].mxu0
      %v777 = vadd.f32 %v581, %v776
      %v778 = vpop.f32.mrb[0].mxu0
      %779 = vdwg.mxu0
      %v780 = vld [vmem:[%s334] sm:$0xff]
      %v781 = vld [vmem:[%s334 + $0x8] sm:$0xff]
      %v782 = vld [vmem:[%s334 + $0x10] sm:$0xff]
      %v783 = vld [vmem:[%s334 + $0x18] sm:$0xff]
      %v784 = vld [vmem:[%s334 + $0x20] sm:$0xff]
      %v785 = vld [vmem:[%s334 + $0x28] sm:$0xff]
      %v786 = vld [vmem:[%s334 + $0x30] sm:$0xff]
      %v787 = vld [vmem:[%s334 + $0x38] sm:$0xff]
      %v788 = vld [vmem:[%s334 + $0x40] sm:$0xff]
      %v789 = vld [vmem:[%s334 + $0x48] sm:$0xff]
      %v790 = vld [vmem:[%s334 + $0x50] sm:$0xff]
      %v791 = vld [vmem:[%s334 + $0x58] sm:$0xff]
      %v792 = vld [vmem:[%s334 + $0x60] sm:$0xff]
      %v793 = vld [vmem:[%s334 + $0x68] sm:$0xff]
      %v794 = vld [vmem:[%s334 + $0x70] sm:$0xff]
      %v795 = vld [vmem:[%s334 + $0x78] sm:$0xff]
      %v796 = vld [vmem:[%s4 + $0xc] sm:$0x3]
      %vm797 = vcmask 15360
      %v799 = vsel %vm797, %v780, 0
      %v802 = vsel %vm797, %v781, 0
      %v805 = vsel %vm797, %v782, 0
      %v808 = vsel %vm797, %v783, 0
      %v811 = vsel %vm797, %v784, 0
      %v814 = vsel %vm797, %v785, 0
      %v817 = vsel %vm797, %v786, 0
      %v820 = vsel %vm797, %v787, 0
      %v823 = vsel %vm797, %v788, 0
      %v826 = vsel %vm797, %v789, 0
      %v829 = vsel %vm797, %v790, 0
      %v832 = vsel %vm797, %v791, 0
      %v835 = vsel %vm797, %v792, 0
      %v838 = vsel %vm797, %v793, 0
      %v841 = vsel %vm797, %v794, 0
      %v844 = vsel %vm797, %v795, 0
      %vm846 = vcmask 1041408
      %v848 = vsel %vm846, %v796, 0
      %850 = vmatprep.subr.mxu0 0.0
      %851 = vmatpush1.msra.mxu0 %v848
      %852 = vmatprep.subr.mxu0 0.0
      %853 = vmatpush1.msra.mxu0 0.0
      %854 = vmatprep.subr.mxu0 0.0
      %855 = vmatpush1.msra.mxu0 0.0
      %856 = vmatprep.subr.mxu0 0.0
      %857 = vmatpush1.msra.mxu0 0.0
      %858 = vmatprep.subr.mxu0 0.0
      %859 = vmatpush1.msra.mxu0 0.0
      %860 = vmatprep.subr.mxu0 0.0
      %861 = vmatpush1.msra.mxu0 0.0
      %862 = vmatprep.subr.mxu0 0.0
      %863 = vmatpush1.msra.mxu0 0.0
      %864 = vmatprep.subr.mxu0 0.0
      %865 = vmatpush1.msra.mxu0 0.0
      %866 = vmatprep.subr.mxu0 0.0
      %867 = vmatpush1.msra.mxu0 0.0
      %868 = vmatprep.subr.mxu0 0.0
      %869 = vmatpush1.msra.mxu0 0.0
      %870 = vmatprep.subr.mxu0 0.0
      %871 = vmatpush1.msra.mxu0 0.0
      %872 = vmatprep.subr.mxu0 0.0
      %873 = vmatpush1.msra.mxu0 0.0
      %874 = vmatprep.subr.mxu0 0.0
      %875 = vmatpush1.msra.mxu0 0.0
      %876 = vmatprep.subr.mxu0 0.0
      %877 = vmatpush1.msra.mxu0 0.0
      %878 = vmatprep.subr.mxu0 0.0
      %879 = vmatpush1.msra.mxu0 0.0
      %880 = vmatprep.subr.mxu0 0.0
      %881 = vmatpush1.msra.mxu0 0.0
      %882 = vmatprep.subr.mxu0 0.0
      %883 = vmatpush1.msra.mxu0 0.0
      %884 = vmatprep.subr.mxu0 0.0
      %885 = vmatpush1.msra.mxu0 0.0
      %886 = vmatprep.subr.mxu0 0.0
      %887 = vmatpush1.msra.mxu0 0.0
      %888 = vmatprep.subr.mxu0 0.0
      %889 = vmatpush1.msra.mxu0 0.0
      %890 = vmatprep.subr.mxu0 0.0
      %891 = vmatpush1.msra.mxu0 0.0
      %892 = vmatprep.subr.mxu0 0.0
      %893 = vmatpush1.msra.mxu0 0.0
      %894 = vmatprep.subr.mxu0 0.0
      %895 = vmatpush1.msra.mxu0 0.0
      %896 = vmatprep.subr.mxu0 0.0
      %897 = vmatpush1.msra.mxu0 0.0
      %898 = vmatprep.subr.mxu0 0.0
      %899 = vmatpush1.msra.mxu0 0.0
      %900 = vmatprep.subr.mxu0 0.0
      %901 = vmatpush1.msra.mxu0 0.0
      %902 = vmatprep.subr.mxu0 0.0
      %903 = vmatpush1.msra.mxu0 0.0
      %904 = vmatprep.subr.mxu0 0.0
      %905 = vmatpush1.msra.mxu0 0.0
      %906 = vmatprep.subr.mxu0 0.0
      %907 = vmatpush1.msra.mxu0 0.0
      %908 = vmatprep.subr.mxu0 0.0
      %909 = vmatpush1.msra.mxu0 0.0
      %910 = vmatprep.subr.mxu0 0.0
      %911 = vmatpush1.msra.mxu0 0.0
      %912 = vmatprep.subr.mxu0 0.0
      %913 = vmatpush1.msra.mxu0 0.0
      %914 = vmatprep.mubr.f32.mxu0 0.0
      %915 = vmatmul.mubr.f32.gmra.mrb[0].mxu0 %v799
      %v916 = vpop.f32.mrb[0].mxu0
      %v917 = vadd.f32 0.0, %v916
      %v918 = vpop.f32.mrb[0].mxu0
      %919 = vmatprep.mubr.f32.mxu0 0.0
      %920 = vmatmul.mubr.f32.gmra.mrb[0].mxu0 %v802
      %v921 = vpop.f32.mrb[0].mxu0
      %v922 = vadd.f32 0.0, %v921
      %v923 = vpop.f32.mrb[0].mxu0
      %924 = vmatprep.mubr.f32.mxu0 0.0
      %925 = vmatmul.mubr.f32.gmra.mrb[0].mxu0 %v805
      %v926 = vpop.f32.mrb[0].mxu0
      %v927 = vadd.f32 0.0, %v926
      %v928 = vpop.f32.mrb[0].mxu0
      %929 = vmatprep.mubr.f32.mxu0 0.0
      %930 = vmatmul.mubr.f32.gmra.mrb[0].mxu0 %v808
      %v931 = vpop.f32.mrb[0].mxu0
      %v932 = vadd.f32 0.0, %v931
      %v933 = vpop.f32.mrb[0].mxu0
      %934 = vmatprep.mubr.f32.mxu0 0.0
      %935 = vmatmul.mubr.f32.gmra.mrb[0].mxu0 %v811
      %v936 = vpop.f32.mrb[0].mxu0
      %v937 = vadd.f32 0.0, %v936
      %v938 = vpop.f32.mrb[0].mxu0
      %939 = vmatprep.mubr.f32.mxu0 0.0
      %940 = vmatmul.mubr.f32.gmra.mrb[0].mxu0 %v814
      %v941 = vpop.f32.mrb[0].mxu0
      %v942 = vadd.f32 0.0, %v941
      %v943 = vpop.f32.mrb[0].mxu0
      %944 = vmatprep.mubr.f32.mxu0 0.0
      %945 = vmatmul.mubr.f32.gmra.mrb[0].mxu0 %v817
      %v946 = vpop.f32.mrb[0].mxu0
      %v947 = vadd.f32 0.0, %v946
      %v948 = vpop.f32.mrb[0].mxu0
      %949 = vmatprep.mubr.f32.mxu0 0.0
      %950 = vmatmul.mubr.f32.gmra.mrb[0].mxu0 %v820
      %v951 = vpop.f32.mrb[0].mxu0
      %v952 = vadd.f32 0.0, %v951
      %v953 = vpop.f32.mrb[0].mxu0
      %954 = vmatprep.mubr.f32.mxu0 0.0
      %955 = vmatmul.mubr.f32.gmra.mrb[0].mxu0 %v823
      %v956 = vpop.f32.mrb[0].mxu0
      %v957 = vadd.f32 0.0, %v956
      %v958 = vpop.f32.mrb[0].mxu0
      %959 = vmatprep.mubr.f32.mxu0 0.0
      %960 = vmatmul.mubr.f32.gmra.mrb[0].mxu0 %v826
      %v961 = vpop.f32.mrb[0].mxu0
      %v962 = vadd.f32 0.0, %v961
      %v963 = vpop.f32.mrb[0].mxu0
      %964 = vmatprep.mubr.f32.mxu0 0.0
      %965 = vmatmul.mubr.f32.gmra.mrb[0].mxu0 %v829
      %v966 = vpop.f32.mrb[0].mxu0
      %v967 = vadd.f32 0.0, %v966
      %v968 = vpop.f32.mrb[0].mxu0
      %969 = vmatprep.mubr.f32.mxu0 0.0
      %970 = vmatmul.mubr.f32.gmra.mrb[0].mxu0 %v832
      %v971 = vpop.f32.mrb[0].mxu0
      %v972 = vadd.f32 0.0, %v971
      %v973 = vpop.f32.mrb[0].mxu0
      %974 = vmatprep.mubr.f32.mxu0 0.0
      %975 = vmatmul.mubr.f32.gmra.mrb[0].mxu0 %v835
      %v976 = vpop.f32.mrb[0].mxu0
      %v977 = vadd.f32 0.0, %v976
      %v978 = vpop.f32.mrb[0].mxu0
      %979 = vmatprep.mubr.f32.mxu0 0.0
      %980 = vmatmul.mubr.f32.gmra.mrb[0].mxu0 %v838
      %v981 = vpop.f32.mrb[0].mxu0
      %v982 = vadd.f32 0.0, %v981
      %v983 = vpop.f32.mrb[0].mxu0
      %984 = vmatprep.mubr.f32.mxu0 0.0
      %985 = vmatmul.mubr.f32.gmra.mrb[0].mxu0 %v841
      %v986 = vpop.f32.mrb[0].mxu0
      %v987 = vadd.f32 0.0, %v986
      %v988 = vpop.f32.mrb[0].mxu0
      %989 = vmatprep.mubr.f32.mxu0 0.0
      %990 = vmatmul.mubr.f32.gmra.mrb[0].mxu0 %v844
      %v991 = vpop.f32.mrb[0].mxu0
      %v992 = vadd.f32 0.0, %v991
      %v993 = vpop.f32.mrb[0].mxu0
      %994 = vdwg.mxu0
      %v995 = vadd.f32 %v702, %v917
      %v996 = vadd.f32 %v707, %v922
      %v997 = vadd.f32 %v712, %v927
      %v998 = vadd.f32 %v717, %v932
      %v999 = vadd.f32 %v722, %v937
      %v1000 = vadd.f32 %v727, %v942
      %v1001 = vadd.f32 %v732, %v947
      %v1002 = vadd.f32 %v737, %v952
      %v1003 = vadd.f32 %v742, %v957
      %v1004 = vadd.f32 %v747, %v962
      %v1005 = vadd.f32 %v752, %v967
      %v1006 = vadd.f32 %v757, %v972
      %v1007 = vadd.f32 %v762, %v977
      %v1008 = vadd.f32 %v767, %v982
      %v1009 = vadd.f32 %v772, %v987
      %v1010 = vadd.f32 %v777, %v992
      %v1011 = vld [vmem:[%s340] sm:$0xff]
      %v1012 = vld [vmem:[%s340 + $0x8] sm:$0xff]
      %v1013 = vld [vmem:[%s340 + $0x10] sm:$0xff]
      %v1014 = vld [vmem:[%s340 + $0x18] sm:$0xff]
      %v1015 = vld [vmem:[%s340 + $0x20] sm:$0xff]
      %v1016 = vld [vmem:[%s340 + $0x28] sm:$0xff]
      %v1017 = vld [vmem:[%s340 + $0x30] sm:$0xff]
      %v1018 = vld [vmem:[%s340 + $0x38] sm:$0xff]
      %v1019 = vld [vmem:[%s340 + $0x40] sm:$0xff]
      %v1020 = vld [vmem:[%s340 + $0x48] sm:$0xff]
      %v1021 = vld [vmem:[%s340 + $0x50] sm:$0xff]
      %v1022 = vld [vmem:[%s340 + $0x58] sm:$0xff]
      %v1023 = vld [vmem:[%s340 + $0x60] sm:$0xff]
      %v1024 = vld [vmem:[%s340 + $0x68] sm:$0xff]
      %v1025 = vld [vmem:[%s340 + $0x70] sm:$0xff]
      %v1026 = vld [vmem:[%s340 + $0x78] sm:$0xff]
      %v1027 = vld [vmem:[%s4 + $0xe] sm:$0x3]
      %v1029 = vsel %vm797, %v1011, 0
      %v1032 = vsel %vm797, %v1012, 0
      %v1035 = vsel %vm797, %v1013, 0
      %v1038 = vsel %vm797, %v1014, 0
      %v1041 = vsel %vm797, %v1015, 0
      %v1044 = vsel %vm797, %v1016, 0
      %v1047 = vsel %vm797, %v1017, 0
      %v1050 = vsel %vm797, %v1018, 0
      %v1053 = vsel %vm797, %v1019, 0
      %v1056 = vsel %vm797, %v1020, 0
      %v1059 = vsel %vm797, %v1021, 0
      %v1062 = vsel %vm797, %v1022, 0
      %v1065 = vsel %vm797, %v1023, 0
      %v1068 = vsel %vm797, %v1024, 0
      %v1071 = vsel %vm797, %v1025, 0
      %v1074 = vsel %vm797, %v1026, 0
      %v1077 = vsel %vm846, %v1027, 0
      %1079 = vmatprep.subr.mxu0 0.0
      %1080 = vmatpush1.msra.mxu0 %v1077
      %1081 = vmatprep.subr.mxu0 0.0
      %1082 = vmatpush1.msra.mxu0 0.0
      %1083 = vmatprep.subr.mxu0 0.0
      %1084 = vmatpush1.msra.mxu0 0.0
      %1085 = vmatprep.subr.mxu0 0.0
      %1086 = vmatpush1.msra.mxu0 0.0
      %1087 = vmatprep.subr.mxu0 0.0
      %1088 = vmatpush1.msra.mxu0 0.0
      %1089 = vmatprep.subr.mxu0 0.0
      %1090 = vmatpush1.msra.mxu0 0.0
      %1091 = vmatprep.subr.mxu0 0.0
      %1092 = vmatpush1.msra.mxu0 0.0
      %1093 = vmatprep.subr.mxu0 0.0
      %1094 = vmatpush1.msra.mxu0 0.0
      %1095 = vmatprep.subr.mxu0 0.0
      %1096 = vmatpush1.msra.mxu0 0.0
      %1097 = vmatprep.subr.mxu0 0.0
      %1098 = vmatpush1.msra.mxu0 0.0
      %1099 = vmatprep.subr.mxu0 0.0
      %1100 = vmatpush1.msra.mxu0 0.0
      %1101 = vmatprep.subr.mxu0 0.0
      %1102 = vmatpush1.msra.mxu0 0.0
      %1103 = vmatprep.subr.mxu0 0.0
      %1104 = vmatpush1.msra.mxu0 0.0
      %1105 = vmatprep.subr.mxu0 0.0
      %1106 = vmatpush1.msra.mxu0 0.0
      %1107 = vmatprep.subr.mxu0 0.0
      %1108 = vmatpush1.msra.mxu0 0.0
      %1109 = vmatprep.subr.mxu0 0.0
      %1110 = vmatpush1.msra.mxu0 0.0
      %1111 = vmatprep.subr.mxu0 0.0
      %1112 = vmatpush1.msra.mxu0 0.0
      %1113 = vmatprep.subr.mxu0 0.0
      %1114 = vmatpush1.msra.mxu0 0.0
      %1115 = vmatprep.subr.mxu0 0.0
      %1116 = vmatpush1.msra.mxu0 0.0
      %1117 = vmatprep.subr.mxu0 0.0
      %1118 = vmatpush1.msra.mxu0 0.0
      %1119 = vmatprep.subr.mxu0 0.0
      %1120 = vmatpush1.msra.mxu0 0.0
      %1121 = vmatprep.subr.mxu0 0.0
      %1122 = vmatpush1.msra.mxu0 0.0
      %1123 = vmatprep.subr.mxu0 0.0
      %1124 = vmatpush1.msra.mxu0 0.0
      %1125 = vmatprep.subr.mxu0 0.0
      %1126 = vmatpush1.msra.mxu0 0.0
      %1127 = vmatprep.subr.mxu0 0.0
      %1128 = vmatpush1.msra.mxu0 0.0
      %1129 = vmatprep.subr.mxu0 0.0
      %1130 = vmatpush1.msra.mxu0 0.0
      %1131 = vmatprep.subr.mxu0 0.0
      %1132 = vmatpush1.msra.mxu0 0.0
      %1133 = vmatprep.subr.mxu0 0.0
      %1134 = vmatpush1.msra.mxu0 0.0
      %1135 = vmatprep.subr.mxu0 0.0
      %1136 = vmatpush1.msra.mxu0 0.0
      %1137 = vmatprep.subr.mxu0 0.0
      %1138 = vmatpush1.msra.mxu0 0.0
      %1139 = vmatprep.subr.mxu0 0.0
      %1140 = vmatpush1.msra.mxu0 0.0
      %1141 = vmatprep.subr.mxu0 0.0
      %1142 = vmatpush1.msra.mxu0 0.0
      %1143 = vmatprep.mubr.f32.mxu0 0.0
      %1144 = vmatmul.mubr.f32.gmra.mrb[0].mxu0 %v1029
      %v1145 = vpop.f32.mrb[0].mxu0
      %v1146 = vadd.f32 0.0, %v1145
      %v1147 = vpop.f32.mrb[0].mxu0
      %1148 = vmatprep.mubr.f32.mxu0 0.0
      %1149 = vmatmul.mubr.f32.gmra.mrb[0].mxu0 %v1032
      %v1150 = vpop.f32.mrb[0].mxu0
      %v1151 = vadd.f32 0.0, %v1150
      %v1152 = vpop.f32.mrb[0].mxu0
      %1153 = vmatprep.mubr.f32.mxu0 0.0
      %1154 = vmatmul.mubr.f32.gmra.mrb[0].mxu0 %v1035
      %v1155 = vpop.f32.mrb[0].mxu0
      %v1156 = vadd.f32 0.0, %v1155
      %v1157 = vpop.f32.mrb[0].mxu0
      %1158 = vmatprep.mubr.f32.mxu0 0.0
      %1159 = vmatmul.mubr.f32.gmra.mrb[0].mxu0 %v1038
      %v1160 = vpop.f32.mrb[0].mxu0
      %v1161 = vadd.f32 0.0, %v1160
      %v1162 = vpop.f32.mrb[0].mxu0
      %1163 = vmatprep.mubr.f32.mxu0 0.0
      %1164 = vmatmul.mubr.f32.gmra.mrb[0].mxu0 %v1041
      %v1165 = vpop.f32.mrb[0].mxu0
      %v1166 = vadd.f32 0.0, %v1165
      %v1167 = vpop.f32.mrb[0].mxu0
      %1168 = vmatprep.mubr.f32.mxu0 0.0
      %1169 = vmatmul.mubr.f32.gmra.mrb[0].mxu0 %v1044
      %v1170 = vpop.f32.mrb[0].mxu0
      %v1171 = vadd.f32 0.0, %v1170
      %v1172 = vpop.f32.mrb[0].mxu0
      %1173 = vmatprep.mubr.f32.mxu0 0.0
      %1174 = vmatmul.mubr.f32.gmra.mrb[0].mxu0 %v1047
      %v1175 = vpop.f32.mrb[0].mxu0
      %v1176 = vadd.f32 0.0, %v1175
      %v1177 = vpop.f32.mrb[0].mxu0
      %1178 = vmatprep.mubr.f32.mxu0 0.0
      %1179 = vmatmul.mubr.f32.gmra.mrb[0].mxu0 %v1050
      %v1180 = vpop.f32.mrb[0].mxu0
      %v1181 = vadd.f32 0.0, %v1180
      %v1182 = vpop.f32.mrb[0].mxu0
      %1183 = vmatprep.mubr.f32.mxu0 0.0
      %1184 = vmatmul.mubr.f32.gmra.mrb[0].mxu0 %v1053
      %v1185 = vpop.f32.mrb[0].mxu0
      %v1186 = vadd.f32 0.0, %v1185
      %v1187 = vpop.f32.mrb[0].mxu0
      %1188 = vmatprep.mubr.f32.mxu0 0.0
      %1189 = vmatmul.mubr.f32.gmra.mrb[0].mxu0 %v1056
      %v1190 = vpop.f32.mrb[0].mxu0
      %v1191 = vadd.f32 0.0, %v1190
      %v1192 = vpop.f32.mrb[0].mxu0
      %1193 = vmatprep.mubr.f32.mxu0 0.0
      %1194 = vmatmul.mubr.f32.gmra.mrb[0].mxu0 %v1059
      %v1195 = vpop.f32.mrb[0].mxu0
      %v1196 = vadd.f32 0.0, %v1195
      %v1197 = vpop.f32.mrb[0].mxu0
      %1198 = vmatprep.mubr.f32.mxu0 0.0
      %1199 = vmatmul.mubr.f32.gmra.mrb[0].mxu0 %v1062
      %v1200 = vpop.f32.mrb[0].mxu0
      %v1201 = vadd.f32 0.0, %v1200
      %v1202 = vpop.f32.mrb[0].mxu0
      %1203 = vmatprep.mubr.f32.mxu0 0.0
      %1204 = vmatmul.mubr.f32.gmra.mrb[0].mxu0 %v1065
      %v1205 = vpop.f32.mrb[0].mxu0
      %v1206 = vadd.f32 0.0, %v1205
      %v1207 = vpop.f32.mrb[0].mxu0
      %1208 = vmatprep.mubr.f32.mxu0 0.0
      %1209 = vmatmul.mubr.f32.gmra.mrb[0].mxu0 %v1068
      %v1210 = vpop.f32.mrb[0].mxu0
      %v1211 = vadd.f32 0.0, %v1210
      %v1212 = vpop.f32.mrb[0].mxu0
      %1213 = vmatprep.mubr.f32.mxu0 0.0
      %1214 = vmatmul.mubr.f32.gmra.mrb[0].mxu0 %v1071
      %v1215 = vpop.f32.mrb[0].mxu0
      %v1216 = vadd.f32 0.0, %v1215
      %v1217 = vpop.f32.mrb[0].mxu0
      %1218 = vmatprep.mubr.f32.mxu0 0.0
      %1219 = vmatmul.mubr.f32.gmra.mrb[0].mxu0 %v1074
      %v1220 = vpop.f32.mrb[0].mxu0
      %v1221 = vadd.f32 0.0, %v1220
      %v1222 = vpop.f32.mrb[0].mxu0
      %1223 = vdwg.mxu0
      %v1224 = vadd.f32 %v995, %v1146
      %v1225 = vadd.f32 %v996, %v1151
      %v1226 = vadd.f32 %v997, %v1156
      %v1227 = vadd.f32 %v998, %v1161
      %v1228 = vadd.f32 %v999, %v1166
      %v1229 = vadd.f32 %v1000, %v1171
      %v1230 = vadd.f32 %v1001, %v1176
      %v1231 = vadd.f32 %v1002, %v1181
      %v1232 = vadd.f32 %v1003, %v1186
      %v1233 = vadd.f32 %v1004, %v1191
      %v1234 = vadd.f32 %v1005, %v1196
      %v1235 = vadd.f32 %v1006, %v1201
      %v1236 = vadd.f32 %v1007, %v1206
      %v1237 = vadd.f32 %v1008, %v1211
      %v1238 = vadd.f32 %v1009, %v1216
      %v1239 = vadd.f32 %v1010, %v1221
      %v1240 = vlaneseq
      %v1241 = vshrl.u32 %v1240, 7
      %v1242 = vsub.s32 0, %v1241
      %v1243 = vrot.slane %v348, %v1242
      %v1244 = vadd.f32 %v1224, %v1243
      %v1245 = vadd.f32 %v1225, %v1243
      %v1246 = vadd.f32 %v1226, %v1243
      %v1247 = vadd.f32 %v1227, %v1243
      %v1248 = vadd.f32 %v1228, %v1243
      %v1249 = vadd.f32 %v1229, %v1243
      %v1250 = vadd.f32 %v1230, %v1243
      %v1251 = vadd.f32 %v1231, %v1243
      %v1252 = vadd.f32 %v1232, %v1243
      %v1253 = vadd.f32 %v1233, %v1243
      %v1254 = vadd.f32 %v1234, %v1243
      %v1255 = vadd.f32 %v1235, %v1243
      %v1256 = vadd.f32 %v1236, %v1243
      %v1257 = vadd.f32 %v1237, %v1243
      %v1258 = vadd.f32 %v1238, %v1243
      %v1259 = vadd.f32 %v1239, %v1243
      %v1260 = vmul.f32 %v1244, 0.01
      %v1261 = vmul.f32 %v1245, 0.01
      %v1262 = vmul.f32 %v1246, 0.01
      %v1263 = vmul.f32 %v1247, 0.01
      %v1264 = vmul.f32 %v1248, 0.01
      %v1265 = vmul.f32 %v1249, 0.01
      %v1266 = vmul.f32 %v1250, 0.01
      %v1267 = vmul.f32 %v1251, 0.01
      %v1268 = vmul.f32 %v1252, 0.01
      %v1269 = vmul.f32 %v1253, 0.01
      %v1270 = vmul.f32 %v1254, 0.01
      %v1271 = vmul.f32 %v1255, 0.01
      %v1272 = vmul.f32 %v1256, 0.01
      %v1273 = vmul.f32 %v1257, 0.01
      %v1274 = vmul.f32 %v1258, 0.01
      %v1275 = vmul.f32 %v1259, 0.01
      %v1276 = vmax.f32 %v1244, %v1260
      %v1277 = vmax.f32 %v1245, %v1261
      %v1278 = vmax.f32 %v1246, %v1262
      %v1279 = vmax.f32 %v1247, %v1263
      %v1280 = vmax.f32 %v1248, %v1264
      %v1281 = vmax.f32 %v1249, %v1265
      %v1282 = vmax.f32 %v1250, %v1266
      %v1283 = vmax.f32 %v1251, %v1267
      %v1284 = vmax.f32 %v1252, %v1268
      %v1285 = vmax.f32 %v1253, %v1269
      %v1286 = vmax.f32 %v1254, %v1270
      %v1287 = vmax.f32 %v1255, %v1271
      %v1288 = vmax.f32 %v1256, %v1272
      %v1289 = vmax.f32 %v1257, %v1273
      %v1290 = vmax.f32 %v1258, %v1274
      %v1291 = vmax.f32 %v1259, %v1275
      %v1292 = vld [vmem:[%s5] sm:$0xff]
      %v1293 = vld [vmem:[%s5 + $0x8] sm:$0xff]
      %v1294 = vld [vmem:[%s5 + $0x10] sm:$0xff]
      %v1295 = vld [vmem:[%s5 + $0x18] sm:$0xff]
      %v1296 = vld [vmem:[%s5 + $0x20] sm:$0xff]
      %v1297 = vld [vmem:[%s5 + $0x28] sm:$0xff]
      %v1298 = vld [vmem:[%s5 + $0x30] sm:$0xff]
      %v1299 = vld [vmem:[%s5 + $0x38] sm:$0xff]
      %v1300 = vlaneseq
      %v1301 = vshrl.u32 %v1300, 7
      %v1302 = vsub.s32 0, %v1301
      %v1303 = vrot.slane %v349, %v1302
      %vm1304 = vcmask 523264
      %v1306 = vsel %vm1304, %v1276, 0
      %v1309 = vsel %vm1304, %v1277, 0
      %v1312 = vsel %vm1304, %v1278, 0
      %v1315 = vsel %vm1304, %v1279, 0
      %v1318 = vsel %vm1304, %v1280, 0
      %v1321 = vsel %vm1304, %v1281, 0
      %v1324 = vsel %vm1304, %v1282, 0
      %v1327 = vsel %vm1304, %v1283, 0
      %v1330 = vsel %vm1304, %v1284, 0
      %v1333 = vsel %vm1304, %v1285, 0
      %v1336 = vsel %vm1304, %v1286, 0
      %v1339 = vsel %vm1304, %v1287, 0
      %v1342 = vsel %vm1304, %v1288, 0
      %v1345 = vsel %vm1304, %v1289, 0
      %v1348 = vsel %vm1304, %v1290, 0
      %v1351 = vsel %vm1304, %v1291, 0
      %1353 = vmatprep.subr.mxu0 0.0
      %1354 = vmatpush1.msra.mxu0 %v1292
      %1355 = vmatprep.subr.mxu0 0.0
      %1356 = vmatpush1.msra.mxu0 %v1293
      %1357 = vmatprep.subr.mxu0 0.0
      %1358 = vmatpush1.msra.mxu0 %v1294
      %1359 = vmatprep.subr.mxu0 0.0
      %1360 = vmatpush1.msra.mxu0 %v1295
      %1361 = vmatprep.subr.mxu0 0.0
      %1362 = vmatpush1.msra.mxu0 %v1296
      %1363 = vmatprep.subr.mxu0 0.0
      %1364 = vmatpush1.msra.mxu0 %v1297
      %1365 = vmatprep.subr.mxu0 0.0
      %1366 = vmatpush1.msra.mxu0 %v1298
      %1367 = vmatprep.subr.mxu0 0.0
      %1368 = vmatpush1.msra.mxu0 %v1299
      %1369 = vmatprep.subr.mxu0 0.0
      %1370 = vmatpush1.msra.mxu0 0.0
      %1371 = vmatprep.subr.mxu0 0.0
      %1372 = vmatpush1.msra.mxu0 0.0
      %1373 = vmatprep.subr.mxu0 0.0
      %1374 = vmatpush1.msra.mxu0 0.0
      %1375 = vmatprep.subr.mxu0 0.0
      %1376 = vmatpush1.msra.mxu0 0.0
      %1377 = vmatprep.subr.mxu0 0.0
      %1378 = vmatpush1.msra.mxu0 0.0
      %1379 = vmatprep.subr.mxu0 0.0
      %1380 = vmatpush1.msra.mxu0 0.0
      %1381 = vmatprep.subr.mxu0 0.0
      %1382 = vmatpush1.msra.mxu0 0.0
      %1383 = vmatprep.subr.mxu0 0.0
      %1384 = vmatpush1.msra.mxu0 0.0
      %1385 = vmatprep.subr.mxu0 0.0
      %1386 = vmatpush1.msra.mxu0 0.0
      %1387 = vmatprep.subr.mxu0 0.0
      %1388 = vmatpush1.msra.mxu0 0.0
      %1389 = vmatprep.subr.mxu0 0.0
      %1390 = vmatpush1.msra.mxu0 0.0
      %1391 = vmatprep.subr.mxu0 0.0
      %1392 = vmatpush1.msra.mxu0 0.0
      %1393 = vmatprep.subr.mxu0 0.0
      %1394 = vmatpush1.msra.mxu0 0.0
      %1395 = vmatprep.subr.mxu0 0.0
      %1396 = vmatpush1.msra.mxu0 0.0
      %1397 = vmatprep.subr.mxu0 0.0
      %1398 = vmatpush1.msra.mxu0 0.0
      %1399 = vmatprep.subr.mxu0 0.0
      %1400 = vmatpush1.msra.mxu0 0.0
      %1401 = vmatprep.subr.mxu0 0.0
      %1402 = vmatpush1.msra.mxu0 0.0
      %1403 = vmatprep.subr.mxu0 0.0
      %1404 = vmatpush1.msra.mxu0 0.0
      %1405 = vmatprep.subr.mxu0 0.0
      %1406 = vmatpush1.msra.mxu0 0.0
      %1407 = vmatprep.subr.mxu0 0.0
      %1408 = vmatpush1.msra.mxu0 0.0
      %1409 = vmatprep.subr.mxu0 0.0
      %1410 = vmatpush1.msra.mxu0 0.0
      %1411 = vmatprep.subr.mxu0 0.0
      %1412 = vmatpush1.msra.mxu0 0.0
      %1413 = vmatprep.subr.mxu0 0.0
      %1414 = vmatpush1.msra.mxu0 0.0
      %1415 = vmatprep.subr.mxu0 0.0
      %1416 = vmatpush1.msra.mxu0 0.0
      %1417 = vmatprep.mubr.f32.mxu0 0.0
      %1418 = vmatmul.mubr.f32.gmra.mrb[0].mxu0 %v1306
      %v1419 = vpop.f32.mrb[0].mxu0
      %v1420 = vadd.f32 %v1303, %v1419
      %v1421 = vpop.f32.mrb[0].mxu0
      %1422 = vmatprep.mubr.f32.mxu0 0.0
      %1423 = vmatmul.mubr.f32.gmra.mrb[0].mxu0 %v1309
      %v1424 = vpop.f32.mrb[0].mxu0
      %v1425 = vadd.f32 %v1303, %v1424
      %v1426 = vpop.f32.mrb[0].mxu0
      %1427 = vmatprep.mubr.f32.mxu0 0.0
      %1428 = vmatmul.mubr.f32.gmra.mrb[0].mxu0 %v1312
      %v1429 = vpop.f32.mrb[0].mxu0
      %v1430 = vadd.f32 %v1303, %v1429
      %v1431 = vpop.f32.mrb[0].mxu0
      %1432 = vmatprep.mubr.f32.mxu0 0.0
      %1433 = vmatmul.mubr.f32.gmra.mrb[0].mxu0 %v1315
      %v1434 = vpop.f32.mrb[0].mxu0
      %v1435 = vadd.f32 %v1303, %v1434
      %v1436 = vpop.f32.mrb[0].mxu0
      %1437 = vmatprep.mubr.f32.mxu0 0.0
      %1438 = vmatmul.mubr.f32.gmra.mrb[0].mxu0 %v1318
      %v1439 = vpop.f32.mrb[0].mxu0
      %v1440 = vadd.f32 %v1303, %v1439
      %v1441 = vpop.f32.mrb[0].mxu0
      %1442 = vmatprep.mubr.f32.mxu0 0.0
      %1443 = vmatmul.mubr.f32.gmra.mrb[0].mxu0 %v1321
      %v1444 = vpop.f32.mrb[0].mxu0
      %v1445 = vadd.f32 %v1303, %v1444
      %v1446 = vpop.f32.mrb[0].mxu0
      %1447 = vmatprep.mubr.f32.mxu0 0.0
      %1448 = vmatmul.mubr.f32.gmra.mrb[0].mxu0 %v1324
      %v1449 = vpop.f32.mrb[0].mxu0
      %v1450 = vadd.f32 %v1303, %v1449
      %v1451 = vpop.f32.mrb[0].mxu0
      %1452 = vmatprep.mubr.f32.mxu0 0.0
      %1453 = vmatmul.mubr.f32.gmra.mrb[0].mxu0 %v1327
      %v1454 = vpop.f32.mrb[0].mxu0
      %v1455 = vadd.f32 %v1303, %v1454
      %v1456 = vpop.f32.mrb[0].mxu0
      %1457 = vmatprep.mubr.f32.mxu0 0.0
      %1458 = vmatmul.mubr.f32.gmra.mrb[0].mxu0 %v1330
      %v1459 = vpop.f32.mrb[0].mxu0
      %v1460 = vadd.f32 %v1303, %v1459
      %v1461 = vpop.f32.mrb[0].mxu0
      %1462 = vmatprep.mubr.f32.mxu0 0.0
      %1463 = vmatmul.mubr.f32.gmra.mrb[0].mxu0 %v1333
      %v1464 = vpop.f32.mrb[0].mxu0
      %v1465 = vadd.f32 %v1303, %v1464
      %v1466 = vpop.f32.mrb[0].mxu0
      %1467 = vmatprep.mubr.f32.mxu0 0.0
      %1468 = vmatmul.mubr.f32.gmra.mrb[0].mxu0 %v1336
      %v1469 = vpop.f32.mrb[0].mxu0
      %v1470 = vadd.f32 %v1303, %v1469
      %v1471 = vpop.f32.mrb[0].mxu0
      %1472 = vmatprep.mubr.f32.mxu0 0.0
      %1473 = vmatmul.mubr.f32.gmra.mrb[0].mxu0 %v1339
      %v1474 = vpop.f32.mrb[0].mxu0
      %v1475 = vadd.f32 %v1303, %v1474
      %v1476 = vpop.f32.mrb[0].mxu0
      %1477 = vmatprep.mubr.f32.mxu0 0.0
      %1478 = vmatmul.mubr.f32.gmra.mrb[0].mxu0 %v1342
      %v1479 = vpop.f32.mrb[0].mxu0
      %v1480 = vadd.f32 %v1303, %v1479
      %v1481 = vpop.f32.mrb[0].mxu0
      %1482 = vmatprep.mubr.f32.mxu0 0.0
      %1483 = vmatmul.mubr.f32.gmra.mrb[0].mxu0 %v1345
      %v1484 = vpop.f32.mrb[0].mxu0
      %v1485 = vadd.f32 %v1303, %v1484
      %v1486 = vpop.f32.mrb[0].mxu0
      %1487 = vmatprep.mubr.f32.mxu0 0.0
      %1488 = vmatmul.mubr.f32.gmra.mrb[0].mxu0 %v1348
      %v1489 = vpop.f32.mrb[0].mxu0
      %v1490 = vadd.f32 %v1303, %v1489
      %v1491 = vpop.f32.mrb[0].mxu0
      %1492 = vmatprep.mubr.f32.mxu0 0.0
      %1493 = vmatmul.mubr.f32.gmra.mrb[0].mxu0 %v1351
      %v1494 = vpop.f32.mrb[0].mxu0
      %v1495 = vadd.f32 %v1303, %v1494
      %v1496 = vpop.f32.mrb[0].mxu0
      %1497 = vdwg.mxu0
      %v1498 = vmul.f32 %v1420, 0.01
      %v1499 = vmul.f32 %v1425, 0.01
      %v1500 = vmul.f32 %v1430, 0.01
      %v1501 = vmul.f32 %v1435, 0.01
      %v1502 = vmul.f32 %v1440, 0.01
      %v1503 = vmul.f32 %v1445, 0.01
      %v1504 = vmul.f32 %v1450, 0.01
      %v1505 = vmul.f32 %v1455, 0.01
      %v1506 = vmul.f32 %v1460, 0.01
      %v1507 = vmul.f32 %v1465, 0.01
      %v1508 = vmul.f32 %v1470, 0.01
      %v1509 = vmul.f32 %v1475, 0.01
      %v1510 = vmul.f32 %v1480, 0.01
      %v1511 = vmul.f32 %v1485, 0.01
      %v1512 = vmul.f32 %v1490, 0.01
      %v1513 = vmul.f32 %v1495, 0.01
      %v1514 = vmax.f32 %v1420, %v1498
      %v1515 = vmax.f32 %v1425, %v1499
      %v1516 = vmax.f32 %v1430, %v1500
      %v1517 = vmax.f32 %v1435, %v1501
      %v1518 = vmax.f32 %v1440, %v1502
      %v1519 = vmax.f32 %v1445, %v1503
      %v1520 = vmax.f32 %v1450, %v1504
      %v1521 = vmax.f32 %v1455, %v1505
      %v1522 = vmax.f32 %v1460, %v1506
      %v1523 = vmax.f32 %v1465, %v1507
      %v1524 = vmax.f32 %v1470, %v1508
      %v1525 = vmax.f32 %v1475, %v1509
      %v1526 = vmax.f32 %v1480, %v1510
      %v1527 = vmax.f32 %v1485, %v1511
      %v1528 = vmax.f32 %v1490, %v1512
      %v1529 = vmax.f32 %v1495, %v1513
      %v1530 = vlaneseq
      %v1531 = vshrl.u32 %v1530, 7
      %v1532 = vsub.s32 0, %v1531
      %v1533 = vrot.slane %v350, %v1532
      %v1534 = vmul.f32 %v1514, %v1533
      %v1535 = vmul.f32 %v1515, %v1533
      %v1536 = vmul.f32 %v1516, %v1533
      %v1537 = vmul.f32 %v1517, %v1533
      %v1538 = vmul.f32 %v1518, %v1533
      %v1539 = vmul.f32 %v1519, %v1533
      %v1540 = vmul.f32 %v1520, %v1533
      %v1541 = vmul.f32 %v1521, %v1533
      %v1542 = vmul.f32 %v1522, %v1533
      %v1543 = vmul.f32 %v1523, %v1533
      %v1544 = vmul.f32 %v1524, %v1533
      %v1545 = vmul.f32 %v1525, %v1533
      %v1546 = vmul.f32 %v1526, %v1533
      %v1547 = vmul.f32 %v1527, %v1533
      %v1548 = vmul.f32 %v1528, %v1533
      %v1549 = vmul.f32 %v1529, %v1533
      %vm1550 = vcmask 261120
      %v1551 = vsel %vm1550, %v1534, 0.0
      %1552 = vadd.xlane.f32.xlu0 %v1551
      %v1553 = vpop.xlane.xlu0 %1552
      %v1554 = vsel %vm1550, %v1535, 0.0
      %1555 = vadd.xlane.f32.xlu0 %v1554
      %v1556 = vpop.xlane.xlu0 %1555
      %v1557 = vsel %vm1550, %v1536, 0.0
      %1558 = vadd.xlane.f32.xlu0 %v1557
      %v1559 = vpop.xlane.xlu0 %1558
      %v1560 = vsel %vm1550, %v1537, 0.0
      %1561 = vadd.xlane.f32.xlu0 %v1560
      %v1562 = vpop.xlane.xlu0 %1561
      %v1563 = vsel %vm1550, %v1538, 0.0
      %1564 = vadd.xlane.f32.xlu0 %v1563
      %v1565 = vpop.xlane.xlu0 %1564
      %v1566 = vsel %vm1550, %v1539, 0.0
      %1567 = vadd.xlane.f32.xlu0 %v1566
      %v1568 = vpop.xlane.xlu0 %1567
      %v1569 = vsel %vm1550, %v1540, 0.0
      %1570 = vadd.xlane.f32.xlu0 %v1569
      %v1571 = vpop.xlane.xlu0 %1570
      %v1572 = vsel %vm1550, %v1541, 0.0
      %1573 = vadd.xlane.f32.xlu0 %v1572
      %v1574 = vpop.xlane.xlu0 %1573
      %v1575 = vsel %vm1550, %v1542, 0.0
      %1576 = vadd.xlane.f32.xlu0 %v1575
      %v1577 = vpop.xlane.xlu0 %1576
      %v1578 = vsel %vm1550, %v1543, 0.0
      %1579 = vadd.xlane.f32.xlu0 %v1578
      %v1580 = vpop.xlane.xlu0 %1579
      %v1581 = vsel %vm1550, %v1544, 0.0
      %1582 = vadd.xlane.f32.xlu0 %v1581
      %v1583 = vpop.xlane.xlu0 %1582
      %v1584 = vsel %vm1550, %v1545, 0.0
      %1585 = vadd.xlane.f32.xlu0 %v1584
      %v1586 = vpop.xlane.xlu0 %1585
      %v1587 = vsel %vm1550, %v1546, 0.0
      %1588 = vadd.xlane.f32.xlu0 %v1587
      %v1589 = vpop.xlane.xlu0 %1588
      %v1590 = vsel %vm1550, %v1547, 0.0
      %1591 = vadd.xlane.f32.xlu0 %v1590
      %v1592 = vpop.xlane.xlu0 %1591
      %v1593 = vsel %vm1550, %v1548, 0.0
      %1594 = vadd.xlane.f32.xlu0 %v1593
      %v1595 = vpop.xlane.xlu0 %1594
      %v1596 = vsel %vm1550, %v1549, 0.0
      %1597 = vadd.xlane.f32.xlu0 %v1596
      %v1598 = vpop.xlane.xlu0 %1597
      %v1599 = vlaneseq
      %v1600 = vshrl.u32 %v1599, 7
      %v1601 = vsub.s32 0, %v1600
      %v1602 = vrot.slane %v351, %v1601
      %v1603 = vadd.f32 %v1553, %v1602
      %v1604 = vadd.f32 %v1556, %v1602
      %v1605 = vadd.f32 %v1559, %v1602
      %v1606 = vadd.f32 %v1562, %v1602
      %v1607 = vadd.f32 %v1565, %v1602
      %v1608 = vadd.f32 %v1568, %v1602
      %v1609 = vadd.f32 %v1571, %v1602
      %v1610 = vadd.f32 %v1574, %v1602
      %v1611 = vadd.f32 %v1577, %v1602
      %v1612 = vadd.f32 %v1580, %v1602
      %v1613 = vadd.f32 %v1583, %v1602
      %v1614 = vadd.f32 %v1586, %v1602
      %v1615 = vadd.f32 %v1589, %v1602
      %v1616 = vadd.f32 %v1592, %v1602
      %v1617 = vadd.f32 %v1595, %v1602
      %v1618 = vadd.f32 %v1598, %v1602
      %vm1619 = vcmask 7168
      %1620 = vst.msk [vmem:[%s346] sm:$0xff] %vm1619, %v1603
      %1621 = vst.msk [vmem:[%s346 + $0x8] sm:$0xff] %vm1619, %v1604
      %1622 = vst.msk [vmem:[%s346 + $0x10] sm:$0xff] %vm1619, %v1605
      %1623 = vst.msk [vmem:[%s346 + $0x18] sm:$0xff] %vm1619, %v1606
      %1624 = vst.msk [vmem:[%s346 + $0x20] sm:$0xff] %vm1619, %v1607
      %1625 = vst.msk [vmem:[%s346 + $0x28] sm:$0xff] %vm1619, %v1608
      %1626 = vst.msk [vmem:[%s346 + $0x30] sm:$0xff] %vm1619, %v1609
      %1627 = vst.msk [vmem:[%s346 + $0x38] sm:$0xff] %vm1619, %v1610
      %1628 = vst.msk [vmem:[%s346 + $0x40] sm:$0xff] %vm1619, %v1611
      %1629 = vst.msk [vmem:[%s346 + $0x48] sm:$0xff] %vm1619, %v1612
      %1630 = vst.msk [vmem:[%s346 + $0x50] sm:$0xff] %vm1619, %v1613
      %1631 = vst.msk [vmem:[%s346 + $0x58] sm:$0xff] %vm1619, %v1614
      %1632 = vst.msk [vmem:[%s346 + $0x60] sm:$0xff] %vm1619, %v1615
      %1633 = vst.msk [vmem:[%s346 + $0x68] sm:$0xff] %vm1619, %v1616
      %1634 = vst.msk [vmem:[%s346 + $0x70] sm:$0xff] %vm1619, %v1617
      %1635 = vst.msk [vmem:[%s346 + $0x78] sm:$0xff] %vm1619, %v1618
      %s1636 = smul.u32 16, %s18
      %p1637 = scmp.lt.s32.totalorder %s1636, 31
      %s1638 = scalar_select %p1637, %s1636, 31
      %s1639 = smul.addr %s1638, 8
      %s1640 = scalar_lea.vmem %s7, %s1639
      // Predicated region
      $region49: #{tpu_custom_call.1} parent=47 // pred_check
        %p1641 = pneg %p203
      $region50: #{tpu_custom_call.1} parent=47 // pred_check_branch
        %1643 = sbr.rel (%p1641) target = $region52
      $region51: #{tpu_custom_call.1} parent=47 // pred_region
        %s1644 = smul.u32 16, %s18
      $region52: #{tpu_custom_call.1} parent=47 // pred_fallthru
        _
    $region48: #{tpu_custom_call.1} parent=5 // pred_fallthru
      _
    %p1645 = scmp.le.s32.totalorder 2, %s13
    // Predicated region
    $region53: #{tpu_custom_call.1} parent=5 // pred_check
      %p1646 = pneg %p1645
    $region54: #{tpu_custom_call.1} parent=5 // pred_check_branch
      %1648 = sbr.rel (%p1646) target = $region56
    $region55: #{tpu_custom_call.1} parent=5 // pred_region
      %s1649 = ssub.s32 %s13, 2
      // Predicated region
      $region57: #{tpu_custom_call.1} parent=55 // pred_check
        %p1650 = pneg %p209
      $region58: #{tpu_custom_call.1} parent=55 // pred_check_branch
        %1652 = sbr.rel (%p1650) target = $region60
      $region59: #{tpu_custom_call.1} parent=55 // pred_region
        %s1653 = smul.u32 16, %s19
        %p1654 = scmp.lt.s32.totalorder %s1653, 31
        %s1655 = scalar_select %p1654, %s1653, 31
        %s1656 = smul.addr %s1655, 8
        %s1657 = scalar_lea.vmem %s7, %s1656
      $region60: #{tpu_custom_call.1} parent=55 // pred_fallthru
        _
    $region56: #{tpu_custom_call.1} parent=5 // pred_fallthru
      _
  $region6: #{tpu_custom_call.1} parent=0 // loop_footer
    %s17 = sadd.s32 1, %s13
  $region7: #{tpu_custom_call.1} parent=0 // loop_footer_branch
    %12 = sbr.rel target = $region3
  $region8: #{tpu_custom_call.1} parent=0 // loop_exit
    _

</llo_original>
